<compile_context>
chip_gen: v7x
topology: tpu7x:2x2x1
jax: 0.10.0
libtpu: 0.0.40
codegen_flags: <defaults>
</compile_context>

<pallas_src>
import math
import functools

import jax
import jax.numpy as jnp
import numpy as np
from jax import lax
from jax.experimental import pallas as pl
from jax.experimental.pallas import tpu as pltpu


def _layernorm(v, g, b, eps=1e-5):
    mu = jnp.mean(v, axis=-1, keepdims=True)
    var = jnp.mean((v - mu) ** 2, axis=-1, keepdims=True)
    return (v - mu) * lax.rsqrt(var + eps) * g + b


def _new_gelu(u):
    # 0.5 * u * (1 + tanh(sqrt(2/pi) * (u + 0.044715 * u^3)))
    c = math.sqrt(2.0 / math.pi)
    return 0.5 * u * (1.0 + jnp.tanh(c * (u + 0.044715 * u * u * u)))


def _block_kernel(
    x_ref,
    ln1_g_ref, ln1_b_ref,
    wqkv_ref, bqkv_ref,
    wo_ref, bo_ref,
    ln2_g_ref, ln2_b_ref,
    w1_ref, b1_ref, w2_ref, b2_ref,
    out_ref,
    ctx_scr,
    *, n_heads: int, seq_len: int, compute_dtype,
):
    S_pad, D = x_ref.shape
    H = n_heads
    dk = D // H

    # ---------------- attention (pre-LN) ----------------
    x = x_ref[...].astype(jnp.float32)                           # (S_pad, D)
    h1 = _layernorm(x, ln1_g_ref[...], ln1_b_ref[...])           # f32 LN math
    h1c = h1.astype(compute_dtype)

    # Fused full-width QKV projection: (S,D) @ (D,3D).  The 1/sqrt(dk) scale
    # is already folded into the Q columns of wqkv / bqkv on the host.
    qkv = jnp.dot(h1c, wqkv_ref[...],
                  preferred_element_type=jnp.float32) + bqkv_ref[...]

    # Additive mask for padded key columns (static at trace time).
    if seq_len < S_pad:
        col = lax.broadcasted_iota(jnp.int32, (1, S_pad), 1)
        neg = jnp.where(col < seq_len, 0.0, -1e9).astype(jnp.float32)
    else:
        neg = None

    # Heads: fully unrolled loop (static slices) over score/softmax/ctx only.
    for h in range(H):
        q = qkv[:, h * dk:(h + 1) * dk]
        k = qkv[:, D + h * dk:D + (h + 1) * dk]
        v = qkv[:, 2 * D + h * dk:2 * D + (h + 1) * dk]
        # scores: contract dk-vs-dk directly (no explicit K^T materialized).
        s = lax.dot_general(
            q.astype(compute_dtype), k.astype(compute_dtype),
            dimension_numbers=(((1,), (1,)), ((), ())),
            preferred_element_type=jnp.float32)                  # (S_pad, S_pad)
        if neg is not None:
            s = s + neg
        s = s - jnp.max(s, axis=-1, keepdims=True)
        e = jnp.exp(s)
        p = e * pl.reciprocal(jnp.sum(e, axis=-1, keepdims=True), approx=True)
        ctx_h = jnp.dot(p.astype(compute_dtype), v.astype(compute_dtype),
                        preferred_element_type=jnp.float32)      # (S_pad, dk)
        ctx_scr[:, h * dk:(h + 1) * dk] = ctx_h.astype(compute_dtype)

    # Output projection with a single full-width matmul (== concat(heads)@Wo).
    attn = jnp.dot(ctx_scr[...], wo_ref[...],
                   preferred_element_type=jnp.float32) + bo_ref[...]
    x1 = x + attn                                                 # 1st residual

    # ---------------- MLP (pre-LN) ----------------
    h2 = _layernorm(x1, ln2_g_ref[...], ln2_b_ref[...]).astype(compute_dtype)
    m = jnp.dot(h2, w1_ref[...],
                preferred_element_type=jnp.float32) + b1_ref[...]
    m = _new_gelu(m)                                              # f32 elementwise
    y = jnp.dot(m.astype(compute_dtype), w2_ref[...],
                preferred_element_type=jnp.float32) + b2_ref[...]

    out_ref[...] = (x1 + y).astype(out_ref.dtype)                 # 2nd residual


def _vmem_limit_bytes():
    # Generation-aware: ~80% of physical VMEM (v5e/v6e: ~102 MiB, v7x: ~51 MiB).
    # Fall back to 48 MiB (above scoped defaults, below v7x physical 64 MiB).
    try:
        return int(pltpu.get_tpu_info().vmem_capacity_bytes * 0.8)
    except Exception:
        return 48 * 1024 * 1024


def transformer_block(x, params, n_heads, *, compute_dtype=jnp.bfloat16,
                      seq_pad_multiple=8):
    """x: (B, S, D) float32. params: dict of pre-transposed ([in, out]) weights."""
    B, S, D = x.shape
    H = n_heads
    assert D % H == 0
    dk = D // H
    I = params["w1"].shape[1]
    cd = compute_dtype
    f32 = jnp.float32
    scale = 1.0 / math.sqrt(dk)

    # Pad S to a multiple of 8 (sublane alignment); padded key columns are
    # masked in-kernel, padded query rows are sliced off below.
    S_pad = ((S + seq_pad_multiple - 1) // seq_pad_multiple) * seq_pad_multiple
    x_in = x if S_pad == S else jnp.pad(x, ((0, 0), (0, S_pad - S), (0, 0)))

    # Host-side weight prep: fold 1/sqrt(dk) into Wq/bq, fuse QKV, cast matmul
    # operands to bf16 (accumulation stays f32 in-kernel).
    wqkv = jnp.concatenate(
        [params["wq"] * scale, params["wk"], params["wv"]], axis=1).astype(cd)
    bqkv = jnp.concatenate(
        [params["bq"] * scale, params["bk"], params["bv"]], axis=1).astype(f32)
    wo = params["wo"].astype(cd)
    w1 = params["w1"].astype(cd)
    w2 = params["w2"].astype(cd)

    args = (
        x_in,
        params["ln1_g"], params["ln1_b"],
        wqkv, bqkv, wo, params["bo"],
        params["ln2_g"], params["ln2_b"],
        w1, params["b1"], w2, params["b2"],
    )

    kernel = functools.partial(_block_kernel, n_heads=H, seq_len=S,
                               compute_dtype=cd)

    # Grid-invariant (weight) blocks: constant index_map -> DMA'd exactly once
    # and kept VMEM-resident across the whole batch.
    def const(shape):
        return pl.BlockSpec(shape, lambda b, _n=len(shape): (0,) * _n)

    in_specs = [
        pl.BlockSpec((None, S_pad, D), lambda b: (b, 0, 0)),   # x (pipelined)
        const((1, D)), const((1, D)),                          # ln1 gamma/beta
        const((D, 3 * D)), const((1, 3 * D)),                  # wqkv, bqkv
        const((D, D)), const((1, D)),                          # wo, bo
        const((1, D)), const((1, D)),                          # ln2 gamma/beta
        const((D, I)), const((1, I)),                          # w1, b1
        const((I, D)), const((1, D)),                          # w2, b2
    ]
    # TODO(synk): for intermediate sizes whose resident w1/w2 would exceed the
    # VMEM budget, switch to an I-outer / batch-inner streamed grid.

    out = pl.pallas_call(
        kernel,
        out_shape=jax.ShapeDtypeStruct((B, S_pad, D), x.dtype),
        grid_spec=pltpu.PrefetchScalarGridSpec(
            num_scalar_prefetch=0,
            grid=(B,),
            in_specs=in_specs,
            out_specs=pl.BlockSpec((None, S_pad, D), lambda b: (b, 0, 0)),
            scratch_shapes=[
                pltpu.VMEM((S_pad, D), cd),   # per-head context assembly
            ],
        ),
        compiler_params=pltpu.CompilerParams(
            dimension_semantics=("parallel",),
            vmem_limit_bytes=_vmem_limit_bytes(),
        ),
    )(*args)

    return out if S_pad == S else out[:, :S, :]


def _reference(x, params, n_heads):
    """Pure-JAX fp32 reference replicating the PyTorch Block forward."""
    B, S, D = x.shape
    dk = D // n_heads

    def ln(v, g, b):
        mu = jnp.mean(v, axis=-1, keepdims=True)
        var = jnp.mean((v - mu) ** 2, axis=-1, keepdims=True)
        return (v - mu) / jnp.sqrt(var + 1e-5) * g[0] + b[0]

    h = ln(x, params["ln1_g"], params["ln1_b"])
    q = h @ params["wq"] + params["bq"][0]
    k = h @ params["wk"] + params["bk"][0]
    v = h @ params["wv"] + params["bv"][0]

    def split(t):  # (B,S,D) -> (B,H,S,dk)
        return t.reshape(B, S, n_heads, dk).transpose(0, 2, 1, 3)

    qh, kh, vh = split(q), split(k), split(v)
    s = jnp.einsum("bhqd,bhkd->bhqk", qh, kh) / math.sqrt(dk)
    p = jax.nn.softmax(s, axis=-1)
    ctx = jnp.einsum("bhqk,bhkd->bhqd", p, vh)
    ctx = ctx.transpose(0, 2, 1, 3).reshape(B, S, D)
    attn = ctx @ params["wo"] + params["bo"][0]
    x1 = x + attn
    h2 = ln(x1, params["ln2_g"], params["ln2_b"])
    m = h2 @ params["w1"] + params["b1"][0]
    c = math.sqrt(2.0 / math.pi)
    m = 0.5 * m * (1.0 + jnp.tanh(c * (m + 0.044715 * m ** 3)))
    m = m @ params["w2"] + params["b2"][0]
    return x1 + m


def init_params(key, d_model, mlp_ratio=4):
    I = mlp_ratio * d_model
    ks = jax.random.split(key, 8)
    sd = 0.02

    def w(k, r, c):
        return sd * jax.random.normal(k, (r, c), jnp.float32)

    def bvec(k, n):
        return sd * jax.random.normal(k, (1, n), jnp.float32)

    kq, kk, kv, ko, k1, k2, kb1, kb2 = ks
    bks = jax.random.split(kb1, 6)
    return {
        "ln1_g": jnp.ones((1, d_model), jnp.float32),
        "ln1_b": jnp.zeros((1, d_model), jnp.float32),
        "wq": w(kq, d_model, d_model), "bq": bvec(bks[0], d_model),
        "wk": w(kk, d_model, d_model), "bk": bvec(bks[1], d_model),
        "wv": w(kv, d_model, d_model), "bv": bvec(bks[2], d_model),
        "wo": w(ko, d_model, d_model), "bo": bvec(bks[3], d_model),
        "ln2_g": jnp.ones((1, d_model), jnp.float32),
        "ln2_b": jnp.zeros((1, d_model), jnp.float32),
        "w1": w(k1, d_model, I), "b1": bvec(bks[4], I),
        "w2": w(k2, I, d_model), "b2": bvec(bks[5], d_model),
    }


if __name__ == "__main__":
    key = jax.random.PRNGKey(0)
    k1, k2, k3, k4 = jax.random.split(key, 4)

    # Config 1: S already a multiple of 8 (no padding / masking path).
    B, S, D, H = 2, 8, 32, 4
    x = jax.random.normal(k1, (B, S, D), jnp.float32)
    params = init_params(k2, D)
    out = jax.block_until_ready(transformer_block(x, params, n_heads=H))
    ref = _reference(x, params, n_heads=H)
    assert out.shape == (B, S, D)
    # bf16 matmul operands (+ approx reciprocal) vs. fp32 reference -> loose tol.
    np.testing.assert_allclose(np.asarray(out, np.float32), np.asarray(ref),
                               atol=2e-2, rtol=2e-2)

    # Config 2: S=12 -> padded to 16 in-kernel, exercises key-column masking.
    B2, S2, D2, H2 = 2, 12, 64, 4
    x2 = jax.random.normal(k3, (B2, S2, D2), jnp.float32)
    params2 = init_params(k4, D2)
    out2 = jax.block_until_ready(transformer_block(x2, params2, n_heads=H2))
    ref2 = _reference(x2, params2, n_heads=H2)
    assert out2.shape == (B2, S2, D2)
    np.testing.assert_allclose(np.asarray(out2, np.float32), np.asarray(ref2),
                               atol=2e-2, rtol=2e-2)

    print("KERNEL_OK")
</pallas_src>

<mosaic_0001>
module attributes {stable_mosaic.version = 11 : i64} {
  func.func @_block_kernel(%arg0: i32, %arg1: memref<1x8x32xf32, #tpu.memory_space<vmem>>, %arg2: memref<1x32xf32, #tpu.memory_space<vmem>>, %arg3: memref<1x32xf32, #tpu.memory_space<vmem>>, %arg4: memref<32x96xbf16, #tpu.memory_space<vmem>>, %arg5: memref<1x96xf32, #tpu.memory_space<vmem>>, %arg6: memref<32x32xbf16, #tpu.memory_space<vmem>>, %arg7: memref<1x32xf32, #tpu.memory_space<vmem>>, %arg8: memref<1x32xf32, #tpu.memory_space<vmem>>, %arg9: memref<1x32xf32, #tpu.memory_space<vmem>>, %arg10: memref<32x128xbf16, #tpu.memory_space<vmem>>, %arg11: memref<1x128xf32, #tpu.memory_space<vmem>>, %arg12: memref<128x32xbf16, #tpu.memory_space<vmem>>, %arg13: memref<1x32xf32, #tpu.memory_space<vmem>>, %arg14: memref<1x8x32xf32, #tpu.memory_space<vmem>>, %arg15: memref<8x32xbf16, #tpu.memory_space<vmem>>) attributes {dimension_semantics = [#tpu.dimension_semantics<parallel>], iteration_bounds = array<i64: 2>, scalar_prefetch = 0 : i64, scratch_operands = 1 : i64, tpu.core_type = #tpu.core_type<tc>, window_params = [{transform_indices = @transform_0, window_bounds = array<i64: 1, 8, 32>}, {pipeline_mode = #tpu.pipeline_mode<synchronous>, transform_indices = @transform_1, window_bounds = array<i64: 1, 32>}, {pipeline_mode = #tpu.pipeline_mode<synchronous>, transform_indices = @transform_2, window_bounds = array<i64: 1, 32>}, {pipeline_mode = #tpu.pipeline_mode<synchronous>, transform_indices = @transform_3, window_bounds = array<i64: 32, 96>}, {pipeline_mode = #tpu.pipeline_mode<synchronous>, transform_indices = @transform_4, window_bounds = array<i64: 1, 96>}, {pipeline_mode = #tpu.pipeline_mode<synchronous>, transform_indices = @transform_5, window_bounds = array<i64: 32, 32>}, {pipeline_mode = #tpu.pipeline_mode<synchronous>, transform_indices = @transform_6, window_bounds = array<i64: 1, 32>}, {pipeline_mode = #tpu.pipeline_mode<synchronous>, transform_indices = @transform_7, window_bounds = array<i64: 1, 32>}, {pipeline_mode = #tpu.pipeline_mode<synchronous>, transform_indices = @transform_8, window_bounds = array<i64: 1, 32>}, {pipeline_mode = #tpu.pipeline_mode<synchronous>, transform_indices = @transform_9, window_bounds = array<i64: 32, 128>}, {pipeline_mode = #tpu.pipeline_mode<synchronous>, transform_indices = @transform_10, window_bounds = array<i64: 1, 128>}, {pipeline_mode = #tpu.pipeline_mode<synchronous>, transform_indices = @transform_11, window_bounds = array<i64: 128, 32>}, {pipeline_mode = #tpu.pipeline_mode<synchronous>, transform_indices = @transform_12, window_bounds = array<i64: 1, 32>}, {transform_indices = @transform_13, window_bounds = array<i64: 1, 8, 32>}]} {
    %c0 = arith.constant 0 : index
    %c0_0 = arith.constant 0 : index
    %c0_1 = arith.constant 0 : index
    %0 = vector.load %arg1[%c0, %c0_0, %c0_1] : memref<1x8x32xf32, #tpu.memory_space<vmem>>, vector<1x8x32xf32>
    %1 = vector.shape_cast %0 : vector<1x8x32xf32> to vector<8x32xf32>
    %c0_2 = arith.constant 0 : index
    %c0_3 = arith.constant 0 : index
    %2 = vector.load %arg2[%c0_2, %c0_3] : memref<1x32xf32, #tpu.memory_space<vmem>>, vector<1x32xf32>
    %c0_4 = arith.constant 0 : index
    %c0_5 = arith.constant 0 : index
    %3 = vector.load %arg3[%c0_4, %c0_5] : memref<1x32xf32, #tpu.memory_space<vmem>>, vector<1x32xf32>
    %cst = arith.constant dense<0.000000e+00> : vector<8xf32>
    %4 = vector.multi_reduction <add>, %1, %cst [1] : vector<8x32xf32> to vector<8xf32>
    %5 = vector.shape_cast %4 : vector<8xf32> to vector<8x1xf32>
    %cst_6 = arith.constant 3.200000e+01 : f32
    %6 = vector.broadcast %cst_6 : f32 to vector<8x1xf32>
    %7 = arith.divf %5, %6 : vector<8x1xf32>
    %8 = vector.broadcast %7 : vector<8x1xf32> to vector<8x32xf32>
    %9 = arith.subf %1, %8 : vector<8x32xf32>
    %10 = arith.mulf %9, %9 : vector<8x32xf32>
    %cst_7 = arith.constant dense<0.000000e+00> : vector<8xf32>
    %11 = vector.multi_reduction <add>, %10, %cst_7 [1] : vector<8x32xf32> to vector<8xf32>
    %12 = vector.shape_cast %11 : vector<8xf32> to vector<8x1xf32>
    %cst_8 = arith.constant 3.200000e+01 : f32
    %13 = vector.broadcast %cst_8 : f32 to vector<8x1xf32>
    %14 = arith.divf %12, %13 : vector<8x1xf32>
    %15 = vector.broadcast %7 : vector<8x1xf32> to vector<8x32xf32>
    %16 = arith.subf %1, %15 : vector<8x32xf32>
    %cst_9 = arith.constant 9.99999974E-6 : f32
    %17 = vector.broadcast %cst_9 : f32 to vector<8x1xf32>
    %18 = arith.addf %14, %17 : vector<8x1xf32>
    %19 = math.rsqrt %18 : vector<8x1xf32>
    %20 = vector.broadcast %19 : vector<8x1xf32> to vector<8x32xf32>
    %21 = arith.mulf %16, %20 : vector<8x32xf32>
    %22 = vector.broadcast %2 : vector<1x32xf32> to vector<8x32xf32>
    %23 = arith.mulf %21, %22 : vector<8x32xf32>
    %24 = vector.broadcast %3 : vector<1x32xf32> to vector<8x32xf32>
    %25 = arith.addf %23, %24 : vector<8x32xf32>
    %26 = arith.truncf %25 : vector<8x32xf32> to vector<8x32xbf16>
    %c0_10 = arith.constant 0 : index
    %c0_11 = arith.constant 0 : index
    %27 = vector.load %arg4[%c0_10, %c0_11] : memref<32x96xbf16, #tpu.memory_space<vmem>>, vector<32x96xbf16>
    %cst_12 = arith.constant dense<0.000000e+00> : vector<8x96xf32>
    %28 = tpu.matmul %26, %27, %cst_12 {dimension_numbers = #tpu.dot_dimension_numbers<[1], [0], [0], [1], [0, 0, 1, 1], [], []>} : vector<8x32xbf16>, vector<32x96xbf16>, vector<8x96xf32> -> vector<8x96xf32>
    %c0_13 = arith.constant 0 : index
    %c0_14 = arith.constant 0 : index
    %29 = vector.load %arg5[%c0_13, %c0_14] : memref<1x96xf32, #tpu.memory_space<vmem>>, vector<1x96xf32>
    %30 = vector.broadcast %29 : vector<1x96xf32> to vector<8x96xf32>
    %31 = arith.addf %28, %30 : vector<8x96xf32>
    %32 = vector.extract_strided_slice %31 {offsets = [0, 0], sizes = [8, 8], strides = [1, 1]} : vector<8x96xf32> to vector<8x8xf32>
    %33 = vector.extract_strided_slice %31 {offsets = [0, 32], sizes = [8, 8], strides = [1, 1]} : vector<8x96xf32> to vector<8x8xf32>
    %34 = vector.extract_strided_slice %31 {offsets = [0, 64], sizes = [8, 8], strides = [1, 1]} : vector<8x96xf32> to vector<8x8xf32>
    %35 = arith.truncf %32 : vector<8x8xf32> to vector<8x8xbf16>
    %36 = arith.truncf %33 : vector<8x8xf32> to vector<8x8xbf16>
    %cst_15 = arith.constant dense<0.000000e+00> : vector<8x8xf32>
    %37 = tpu.matmul %35, %36, %cst_15 {dimension_numbers = #tpu.dot_dimension_numbers<[1], [1], [0], [0], [0, 0, 1, 0], [], []>} : vector<8x8xbf16>, vector<8x8xbf16>, vector<8x8xf32> -> vector<8x8xf32>
    %cst_16 = arith.constant dense<0xFF800000> : vector<8xf32>
    %38 = vector.multi_reduction <maximumf>, %37, %cst_16 [1] : vector<8x8xf32> to vector<8xf32>
    %39 = vector.shape_cast %38 : vector<8xf32> to vector<8x1xf32>
    %40 = vector.broadcast %39 : vector<8x1xf32> to vector<8x8xf32>
    %41 = arith.subf %37, %40 : vector<8x8xf32>
    %42 = math.exp %41 : vector<8x8xf32>
    %cst_17 = arith.constant dense<0.000000e+00> : vector<8xf32>
    %43 = vector.multi_reduction <add>, %42, %cst_17 [1] : vector<8x8xf32> to vector<8xf32>
    %44 = vector.shape_cast %43 : vector<8xf32> to vector<8x1xf32>
    %45 = tpu.reciprocal %44 {approx = true} : vector<8x1xf32> -> vector<8x1xf32>
    %46 = vector.broadcast %45 : vector<8x1xf32> to vector<8x8xf32>
    %47 = arith.mulf %42, %46 : vector<8x8xf32>
    %48 = arith.truncf %47 : vector<8x8xf32> to vector<8x8xbf16>
    %49 = arith.truncf %34 : vector<8x8xf32> to vector<8x8xbf16>
    %cst_18 = arith.constant dense<0.000000e+00> : vector<8x8xf32>
    %50 = tpu.matmul %48, %49, %cst_18 {dimension_numbers = #tpu.dot_dimension_numbers<[1], [0], [0], [1], [0, 0, 1, 1], [], []>} : vector<8x8xbf16>, vector<8x8xbf16>, vector<8x8xf32> -> vector<8x8xf32>
    %51 = arith.truncf %50 : vector<8x8xf32> to vector<8x8xbf16>
    %c0_19 = arith.constant 0 : index
    %c0_20 = arith.constant 0 : index
    %52 = vector.load %arg15[%c0_19, %c0_20] : memref<8x32xbf16, #tpu.memory_space<vmem>>, vector<8x8xbf16>
    tpu.vector_store %arg15[%c0_19, %c0_20], %51 {strides = array<i32>} : memref<8x32xbf16, #tpu.memory_space<vmem>>, vector<8x8xbf16>,
    %53 = vector.extract_strided_slice %31 {offsets = [0, 8], sizes = [8, 8], strides = [1, 1]} : vector<8x96xf32> to vector<8x8xf32>
    %54 = vector.extract_strided_slice %31 {offsets = [0, 40], sizes = [8, 8], strides = [1, 1]} : vector<8x96xf32> to vector<8x8xf32>
    %55 = vector.extract_strided_slice %31 {offsets = [0, 72], sizes = [8, 8], strides = [1, 1]} : vector<8x96xf32> to vector<8x8xf32>
    %56 = arith.truncf %53 : vector<8x8xf32> to vector<8x8xbf16>
    %57 = arith.truncf %54 : vector<8x8xf32> to vector<8x8xbf16>
    %cst_21 = arith.constant dense<0.000000e+00> : vector<8x8xf32>
    %58 = tpu.matmul %56, %57, %cst_21 {dimension_numbers = #tpu.dot_dimension_numbers<[1], [1], [0], [0], [0, 0, 1, 0], [], []>} : vector<8x8xbf16>, vector<8x8xbf16>, vector<8x8xf32> -> vector<8x8xf32>
    %cst_22 = arith.constant dense<0xFF800000> : vector<8xf32>
    %59 = vector.multi_reduction <maximumf>, %58, %cst_22 [1] : vector<8x8xf32> to vector<8xf32>
    %60 = vector.shape_cast %59 : vector<8xf32> to vector<8x1xf32>
    %61 = vector.broadcast %60 : vector<8x1xf32> to vector<8x8xf32>
    %62 = arith.subf %58, %61 : vector<8x8xf32>
    %63 = math.exp %62 : vector<8x8xf32>
    %cst_23 = arith.constant dense<0.000000e+00> : vector<8xf32>
    %64 = vector.multi_reduction <add>, %63, %cst_23 [1] : vector<8x8xf32> to vector<8xf32>
    %65 = vector.shape_cast %64 : vector<8xf32> to vector<8x1xf32>
    %66 = tpu.reciprocal %65 {approx = true} : vector<8x1xf32> -> vector<8x1xf32>
    %67 = vector.broadcast %66 : vector<8x1xf32> to vector<8x8xf32>
    %68 = arith.mulf %63, %67 : vector<8x8xf32>
    %69 = arith.truncf %68 : vector<8x8xf32> to vector<8x8xbf16>
    %70 = arith.truncf %55 : vector<8x8xf32> to vector<8x8xbf16>
    %cst_24 = arith.constant dense<0.000000e+00> : vector<8x8xf32>
    %71 = tpu.matmul %69, %70, %cst_24 {dimension_numbers = #tpu.dot_dimension_numbers<[1], [0], [0], [1], [0, 0, 1, 1], [], []>} : vector<8x8xbf16>, vector<8x8xbf16>, vector<8x8xf32> -> vector<8x8xf32>
    %72 = arith.truncf %71 : vector<8x8xf32> to vector<8x8xbf16>
    %c0_25 = arith.constant 0 : index
    %c8 = arith.constant 8 : index
    %73 = vector.load %arg15[%c0_25, %c8] : memref<8x32xbf16, #tpu.memory_space<vmem>>, vector<8x8xbf16>
    tpu.vector_store %arg15[%c0_25, %c8], %72 {strides = array<i32>} : memref<8x32xbf16, #tpu.memory_space<vmem>>, vector<8x8xbf16>,
    %74 = vector.extract_strided_slice %31 {offsets = [0, 16], sizes = [8, 8], strides = [1, 1]} : vector<8x96xf32> to vector<8x8xf32>
    %75 = vector.extract_strided_slice %31 {offsets = [0, 48], sizes = [8, 8], strides = [1, 1]} : vector<8x96xf32> to vector<8x8xf32>
    %76 = vector.extract_strided_slice %31 {offsets = [0, 80], sizes = [8, 8], strides = [1, 1]} : vector<8x96xf32> to vector<8x8xf32>
    %77 = arith.truncf %74 : vector<8x8xf32> to vector<8x8xbf16>
    %78 = arith.truncf %75 : vector<8x8xf32> to vector<8x8xbf16>
    %cst_26 = arith.constant dense<0.000000e+00> : vector<8x8xf32>
    %79 = tpu.matmul %77, %78, %cst_26 {dimension_numbers = #tpu.dot_dimension_numbers<[1], [1], [0], [0], [0, 0, 1, 0], [], []>} : vector<8x8xbf16>, vector<8x8xbf16>, vector<8x8xf32> -> vector<8x8xf32>
    %cst_27 = arith.constant dense<0xFF800000> : vector<8xf32>
    %80 = vector.multi_reduction <maximumf>, %79, %cst_27 [1] : vector<8x8xf32> to vector<8xf32>
    %81 = vector.shape_cast %80 : vector<8xf32> to vector<8x1xf32>
    %82 = vector.broadcast %81 : vector<8x1xf32> to vector<8x8xf32>
    %83 = arith.subf %79, %82 : vector<8x8xf32>
    %84 = math.exp %83 : vector<8x8xf32>
    %cst_28 = arith.constant dense<0.000000e+00> : vector<8xf32>
    %85 = vector.multi_reduction <add>, %84, %cst_28 [1] : vector<8x8xf32> to vector<8xf32>
    %86 = vector.shape_cast %85 : vector<8xf32> to vector<8x1xf32>
    %87 = tpu.reciprocal %86 {approx = true} : vector<8x1xf32> -> vector<8x1xf32>
    %88 = vector.broadcast %87 : vector<8x1xf32> to vector<8x8xf32>
    %89 = arith.mulf %84, %88 : vector<8x8xf32>
    %90 = arith.truncf %89 : vector<8x8xf32> to vector<8x8xbf16>
    %91 = arith.truncf %76 : vector<8x8xf32> to vector<8x8xbf16>
    %cst_29 = arith.constant dense<0.000000e+00> : vector<8x8xf32>
    %92 = tpu.matmul %90, %91, %cst_29 {dimension_numbers = #tpu.dot_dimension_numbers<[1], [0], [0], [1], [0, 0, 1, 1], [], []>} : vector<8x8xbf16>, vector<8x8xbf16>, vector<8x8xf32> -> vector<8x8xf32>
    %93 = arith.truncf %92 : vector<8x8xf32> to vector<8x8xbf16>
    %c0_30 = arith.constant 0 : index
    %c16 = arith.constant 16 : index
    %94 = vector.load %arg15[%c0_30, %c16] : memref<8x32xbf16, #tpu.memory_space<vmem>>, vector<8x8xbf16>
    tpu.vector_store %arg15[%c0_30, %c16], %93 {strides = array<i32>} : memref<8x32xbf16, #tpu.memory_space<vmem>>, vector<8x8xbf16>,
    %95 = vector.extract_strided_slice %31 {offsets = [0, 24], sizes = [8, 8], strides = [1, 1]} : vector<8x96xf32> to vector<8x8xf32>
    %96 = vector.extract_strided_slice %31 {offsets = [0, 56], sizes = [8, 8], strides = [1, 1]} : vector<8x96xf32> to vector<8x8xf32>
    %97 = vector.extract_strided_slice %31 {offsets = [0, 88], sizes = [8, 8], strides = [1, 1]} : vector<8x96xf32> to vector<8x8xf32>
    %98 = arith.truncf %95 : vector<8x8xf32> to vector<8x8xbf16>
    %99 = arith.truncf %96 : vector<8x8xf32> to vector<8x8xbf16>
    %cst_31 = arith.constant dense<0.000000e+00> : vector<8x8xf32>
    %100 = tpu.matmul %98, %99, %cst_31 {dimension_numbers = #tpu.dot_dimension_numbers<[1], [1], [0], [0], [0, 0, 1, 0], [], []>} : vector<8x8xbf16>, vector<8x8xbf16>, vector<8x8xf32> -> vector<8x8xf32>
    %cst_32 = arith.constant dense<0xFF800000> : vector<8xf32>
    %101 = vector.multi_reduction <maximumf>, %100, %cst_32 [1] : vector<8x8xf32> to vector<8xf32>
    %102 = vector.shape_cast %101 : vector<8xf32> to vector<8x1xf32>
    %103 = vector.broadcast %102 : vector<8x1xf32> to vector<8x8xf32>
    %104 = arith.subf %100, %103 : vector<8x8xf32>
    %105 = math.exp %104 : vector<8x8xf32>
    %cst_33 = arith.constant dense<0.000000e+00> : vector<8xf32>
    %106 = vector.multi_reduction <add>, %105, %cst_33 [1] : vector<8x8xf32> to vector<8xf32>
    %107 = vector.shape_cast %106 : vector<8xf32> to vector<8x1xf32>
    %108 = tpu.reciprocal %107 {approx = true} : vector<8x1xf32> -> vector<8x1xf32>
    %109 = vector.broadcast %108 : vector<8x1xf32> to vector<8x8xf32>
    %110 = arith.mulf %105, %109 : vector<8x8xf32>
    %111 = arith.truncf %110 : vector<8x8xf32> to vector<8x8xbf16>
    %112 = arith.truncf %97 : vector<8x8xf32> to vector<8x8xbf16>
    %cst_34 = arith.constant dense<0.000000e+00> : vector<8x8xf32>
    %113 = tpu.matmul %111, %112, %cst_34 {dimension_numbers = #tpu.dot_dimension_numbers<[1], [0], [0], [1], [0, 0, 1, 1], [], []>} : vector<8x8xbf16>, vector<8x8xbf16>, vector<8x8xf32> -> vector<8x8xf32>
    %114 = arith.truncf %113 : vector<8x8xf32> to vector<8x8xbf16>
    %c0_35 = arith.constant 0 : index
    %c24 = arith.constant 24 : index
    %115 = vector.load %arg15[%c0_35, %c24] : memref<8x32xbf16, #tpu.memory_space<vmem>>, vector<8x8xbf16>
    tpu.vector_store %arg15[%c0_35, %c24], %114 {strides = array<i32>} : memref<8x32xbf16, #tpu.memory_space<vmem>>, vector<8x8xbf16>,
    %c0_36 = arith.constant 0 : index
    %c0_37 = arith.constant 0 : index
    %116 = vector.load %arg15[%c0_36, %c0_37] : memref<8x32xbf16, #tpu.memory_space<vmem>>, vector<8x32xbf16>
    %c0_38 = arith.constant 0 : index
    %c0_39 = arith.constant 0 : index
    %117 = vector.load %arg6[%c0_38, %c0_39] : memref<32x32xbf16, #tpu.memory_space<vmem>>, vector<32x32xbf16>
    %cst_40 = arith.constant dense<0.000000e+00> : vector<8x32xf32>
    %118 = tpu.matmul %116, %117, %cst_40 {dimension_numbers = #tpu.dot_dimension_numbers<[1], [0], [0], [1], [0, 0, 1, 1], [], []>} : vector<8x32xbf16>, vector<32x32xbf16>, vector<8x32xf32> -> vector<8x32xf32>
    %c0_41 = arith.constant 0 : index
    %c0_42 = arith.constant 0 : index
    %119 = vector.load %arg7[%c0_41, %c0_42] : memref<1x32xf32, #tpu.memory_space<vmem>>, vector<1x32xf32>
    %120 = vector.broadcast %119 : vector<1x32xf32> to vector<8x32xf32>
    %121 = arith.addf %118, %120 : vector<8x32xf32>
    %122 = arith.addf %1, %121 : vector<8x32xf32>
    %c0_43 = arith.constant 0 : index
    %c0_44 = arith.constant 0 : index
    %123 = vector.load %arg8[%c0_43, %c0_44] : memref<1x32xf32, #tpu.memory_space<vmem>>, vector<1x32xf32>
    %c0_45 = arith.constant 0 : index
    %c0_46 = arith.constant 0 : index
    %124 = vector.load %arg9[%c0_45, %c0_46] : memref<1x32xf32, #tpu.memory_space<vmem>>, vector<1x32xf32>
    %cst_47 = arith.constant dense<0.000000e+00> : vector<8xf32>
    %125 = vector.multi_reduction <add>, %122, %cst_47 [1] : vector<8x32xf32> to vector<8xf32>
    %126 = vector.shape_cast %125 : vector<8xf32> to vector<8x1xf32>
    %cst_48 = arith.constant 3.200000e+01 : f32
    %127 = vector.broadcast %cst_48 : f32 to vector<8x1xf32>
    %128 = arith.divf %126, %127 : vector<8x1xf32>
    %129 = vector.broadcast %128 : vector<8x1xf32> to vector<8x32xf32>
    %130 = arith.subf %122, %129 : vector<8x32xf32>
    %131 = arith.mulf %130, %130 : vector<8x32xf32>
    %cst_49 = arith.constant dense<0.000000e+00> : vector<8xf32>
    %132 = vector.multi_reduction <add>, %131, %cst_49 [1] : vector<8x32xf32> to vector<8xf32>
    %133 = vector.shape_cast %132 : vector<8xf32> to vector<8x1xf32>
    %cst_50 = arith.constant 3.200000e+01 : f32
    %134 = vector.broadcast %cst_50 : f32 to vector<8x1xf32>
    %135 = arith.divf %133, %134 : vector<8x1xf32>
    %136 = vector.broadcast %128 : vector<8x1xf32> to vector<8x32xf32>
    %137 = arith.subf %122, %136 : vector<8x32xf32>
    %cst_51 = arith.constant 9.99999974E-6 : f32
    %138 = vector.broadcast %cst_51 : f32 to vector<8x1xf32>
    %139 = arith.addf %135, %138 : vector<8x1xf32>
    %140 = math.rsqrt %139 : vector<8x1xf32>
    %141 = vector.broadcast %140 : vector<8x1xf32> to vector<8x32xf32>
    %142 = arith.mulf %137, %141 : vector<8x32xf32>
    %143 = vector.broadcast %123 : vector<1x32xf32> to vector<8x32xf32>
    %144 = arith.mulf %142, %143 : vector<8x32xf32>
    %145 = vector.broadcast %124 : vector<1x32xf32> to vector<8x32xf32>
    %146 = arith.addf %144, %145 : vector<8x32xf32>
    %147 = arith.truncf %146 : vector<8x32xf32> to vector<8x32xbf16>
    %c0_52 = arith.constant 0 : index
    %c0_53 = arith.constant 0 : index
    %148 = vector.load %arg10[%c0_52, %c0_53] : memref<32x128xbf16, #tpu.memory_space<vmem>>, vector<32x128xbf16>
    %cst_54 = arith.constant dense<0.000000e+00> : vector<8x128xf32>
    %149 = tpu.matmul %147, %148, %cst_54 {dimension_numbers = #tpu.dot_dimension_numbers<[1], [0], [0], [1], [0, 0, 1, 1], [], []>} : vector<8x32xbf16>, vector<32x128xbf16>, vector<8x128xf32> -> vector<8x128xf32>
    %c0_55 = arith.constant 0 : index
    %c0_56 = arith.constant 0 : index
    %150 = vector.load %arg11[%c0_55, %c0_56] : memref<1x128xf32, #tpu.memory_space<vmem>>, vector<1x128xf32>
    %151 = vector.broadcast %150 : vector<1x128xf32> to vector<8x128xf32>
    %152 = arith.addf %149, %151 : vector<8x128xf32>
    %cst_57 = arith.constant 5.000000e-01 : f32
    %153 = vector.broadcast %cst_57 : f32 to vector<8x128xf32>
    %154 = arith.mulf %153, %152 : vector<8x128xf32>
    %cst_58 = arith.constant 4.471500e-02 : f32
    %155 = vector.broadcast %cst_58 : f32 to vector<8x128xf32>
    %156 = arith.mulf %155, %152 : vector<8x128xf32>
    %157 = arith.mulf %156, %152 : vector<8x128xf32>
    %158 = arith.mulf %157, %152 : vector<8x128xf32>
    %159 = arith.addf %152, %158 : vector<8x128xf32>
    %cst_59 = arith.constant 0.797884583 : f32
    %160 = vector.broadcast %cst_59 : f32 to vector<8x128xf32>
    %161 = arith.mulf %160, %159 : vector<8x128xf32>
    %162 = math.tanh %161 : vector<8x128xf32>
    %cst_60 = arith.constant 1.000000e+00 : f32
    %163 = vector.broadcast %cst_60 : f32 to vector<8x128xf32>
    %164 = arith.addf %163, %162 : vector<8x128xf32>
    %165 = arith.mulf %154, %164 : vector<8x128xf32>
    %166 = arith.truncf %165 : vector<8x128xf32> to vector<8x128xbf16>
    %c0_61 = arith.constant 0 : index
    %c0_62 = arith.constant 0 : index
    %167 = vector.load %arg12[%c0_61, %c0_62] : memref<128x32xbf16, #tpu.memory_space<vmem>>, vector<128x32xbf16>
    %cst_63 = arith.constant dense<0.000000e+00> : vector<8x32xf32>
    %168 = tpu.matmul %166, %167, %cst_63 {dimension_numbers = #tpu.dot_dimension_numbers<[1], [0], [0], [1], [0, 0, 1, 1], [], []>} : vector<8x128xbf16>, vector<128x32xbf16>, vector<8x32xf32> -> vector<8x32xf32>
    %c0_64 = arith.constant 0 : index
    %c0_65 = arith.constant 0 : index
    %169 = vector.load %arg13[%c0_64, %c0_65] : memref<1x32xf32, #tpu.memory_space<vmem>>, vector<1x32xf32>
    %170 = vector.broadcast %169 : vector<1x32xf32> to vector<8x32xf32>
    %171 = arith.addf %168, %170 : vector<8x32xf32>
    %172 = arith.addf %122, %171 : vector<8x32xf32>
    %c0_66 = arith.constant 0 : index
    %c0_67 = arith.constant 0 : index
    %c0_68 = arith.constant 0 : index
    %173 = vector.load %arg14[%c0_66, %c0_67, %c0_68] : memref<1x8x32xf32, #tpu.memory_space<vmem>>, vector<1x8x32xf32>
    %174 = vector.shape_cast %173 : vector<1x8x32xf32> to vector<8x32xf32>
    %175 = vector.shape_cast %172 : vector<8x32xf32> to vector<1x8x32xf32>
    tpu.vector_store %arg14[%c0_66, %c0_67, %c0_68], %175 {strides = array<i32>} : memref<1x8x32xf32, #tpu.memory_space<vmem>>, vector<1x8x32xf32>,
    return
  }
  func.func @transform_0(%arg0: i32) -> (i32, i32, i32) {
    %c0_i32 = arith.constant 0 : i32
    %c0_i32_0 = arith.constant 0 : i32
    %c0_i32_1 = arith.constant 0 : i32
    return %arg0, %c0_i32, %c0_i32_0 : i32, i32, i32
  }
  func.func @transform_1(%arg0: i32) -> (i32, i32) {
    %c0_i32 = arith.constant 0 : i32
    %c0_i32_0 = arith.constant 0 : i32
    %c0_i32_1 = arith.constant 0 : i32
    return %c0_i32, %c0_i32_0 : i32, i32
  }
  func.func @transform_2(%arg0: i32) -> (i32, i32) {
    %c0_i32 = arith.constant 0 : i32
    %c0_i32_0 = arith.constant 0 : i32
    %c0_i32_1 = arith.constant 0 : i32
    return %c0_i32, %c0_i32_0 : i32, i32
  }
  func.func @transform_3(%arg0: i32) -> (i32, i32) {
    %c0_i32 = arith.constant 0 : i32
    %c0_i32_0 = arith.constant 0 : i32
    %c0_i32_1 = arith.constant 0 : i32
    return %c0_i32, %c0_i32_0 : i32, i32
  }
  func.func @transform_4(%arg0: i32) -> (i32, i32) {
    %c0_i32 = arith.constant 0 : i32
    %c0_i32_0 = arith.constant 0 : i32
    %c0_i32_1 = arith.constant 0 : i32
    return %c0_i32, %c0_i32_0 : i32, i32
  }
  func.func @transform_5(%arg0: i32) -> (i32, i32) {
    %c0_i32 = arith.constant 0 : i32
    %c0_i32_0 = arith.constant 0 : i32
    %c0_i32_1 = arith.constant 0 : i32
    return %c0_i32, %c0_i32_0 : i32, i32
  }
  func.func @transform_6(%arg0: i32) -> (i32, i32) {
    %c0_i32 = arith.constant 0 : i32
    %c0_i32_0 = arith.constant 0 : i32
    %c0_i32_1 = arith.constant 0 : i32
    return %c0_i32, %c0_i32_0 : i32, i32
  }
  func.func @transform_7(%arg0: i32) -> (i32, i32) {
    %c0_i32 = arith.constant 0 : i32
    %c0_i32_0 = arith.constant 0 : i32
    %c0_i32_1 = arith.constant 0 : i32
    return %c0_i32, %c0_i32_0 : i32, i32
  }
  func.func @transform_8(%arg0: i32) -> (i32, i32) {
    %c0_i32 = arith.constant 0 : i32
    %c0_i32_0 = arith.constant 0 : i32
    %c0_i32_1 = arith.constant 0 : i32
    return %c0_i32, %c0_i32_0 : i32, i32
  }
  func.func @transform_9(%arg0: i32) -> (i32, i32) {
    %c0_i32 = arith.constant 0 : i32
    %c0_i32_0 = arith.constant 0 : i32
    %c0_i32_1 = arith.constant 0 : i32
    return %c0_i32, %c0_i32_0 : i32, i32
  }
  func.func @transform_10(%arg0: i32) -> (i32, i32) {
    %c0_i32 = arith.constant 0 : i32
    %c0_i32_0 = arith.constant 0 : i32
    %c0_i32_1 = arith.constant 0 : i32
    return %c0_i32, %c0_i32_0 : i32, i32
  }
  func.func @transform_11(%arg0: i32) -> (i32, i32) {
    %c0_i32 = arith.constant 0 : i32
    %c0_i32_0 = arith.constant 0 : i32
    %c0_i32_1 = arith.constant 0 : i32
    return %c0_i32, %c0_i32_0 : i32, i32
  }
  func.func @transform_12(%arg0: i32) -> (i32, i32) {
    %c0_i32 = arith.constant 0 : i32
    %c0_i32_0 = arith.constant 0 : i32
    %c0_i32_1 = arith.constant 0 : i32
    return %c0_i32, %c0_i32_0 : i32, i32
  }
  func.func @transform_13(%arg0: i32) -> (i32, i32, i32) {
    %c0_i32 = arith.constant 0 : i32
    %c0_i32_0 = arith.constant 0 : i32
    %c0_i32_1 = arith.constant 0 : i32
    return %arg0, %c0_i32, %c0_i32_0 : i32, i32, i32
  }
}

</mosaic_0001>

<llo_original>
// kernel: tpu_custom_call.1
$region0: #{tpu_custom_call.1}
  #allocation0 [shape = 'u32[]', space=smem, size = 0x4, offset = 0x4, fixed_abs, tag = 'smem constant byte address 0x4 - core index']
  #allocation1 [shape = 'u32[144,128]{1,0:T(1,128)}', space=vmem, size = 0x12000, scoped, tag = 'internal scratch']
  #allocation2 [shape = 'bf16[8,32]{1,0:T(8,128)(2,1)}', space=vmem, size = 0x800, scoped, tag = 'scratch operand']
  %s0 = inlined_call_operand.vmem [shape: f32[2,8,32], index: 0, kind: input, shape index: {}]
  %s1 = inlined_call_operand.vmem [shape: f32[1,32], index: 1, kind: input, shape index: {}]
  %s2 = inlined_call_operand.vmem [shape: f32[1,32], index: 2, kind: input, shape index: {}]
  %s3 = inlined_call_operand.vmem [shape: bf16[32,96], index: 3, kind: input, shape index: {}]
  %s4 = inlined_call_operand.vmem [shape: f32[1,96], index: 4, kind: input, shape index: {}]
  %s5 = inlined_call_operand.vmem [shape: bf16[32,32], index: 5, kind: input, shape index: {}]
  %s6 = inlined_call_operand.vmem [shape: f32[1,32], index: 6, kind: input, shape index: {}]
  %s7 = inlined_call_operand.vmem [shape: f32[1,32], index: 7, kind: input, shape index: {}]
  %s8 = inlined_call_operand.vmem [shape: f32[1,32], index: 8, kind: input, shape index: {}]
  %s9 = inlined_call_operand.vmem [shape: bf16[32,128], index: 9, kind: input, shape index: {}]
  %s10 = inlined_call_operand.vmem [shape: f32[1,128], index: 10, kind: input, shape index: {}]
  %s11 = inlined_call_operand.vmem [shape: bf16[128,32], index: 11, kind: input, shape index: {}]
  %s12 = inlined_call_operand.vmem [shape: f32[1,32], index: 12, kind: input, shape index: {}]
  %s13 = inlined_call_operand.hbm [shape: f32[2,8,32], index: 13, kind: output, shape index: {}]
  %s14 = sld [smem:[#allocation0]]
  $region85: #{tpu_custom_call.1} parent=0
    _
  %s16 = ssub.s32 1, %s14
  %s17 = scalar_select 0, %s16, %s14
  $region1: #{tpu_custom_call.1} parent=0
    #allocation3 [shape = 'u8[8192]{0}', space=vmem, size = 0x2000, scoped, tag = 'output window, operand 0']
    #allocation4 [shape = 's32[2]{0}', space=sflag, size = 0x8, scoped, tag = 'scoped memory for tpu_custom_call.1']
    %18 = vsyncpa [#allocation4], 0
    %s19 = scalar_lea.sflag [#allocation4], 1
    %20 = vsyncpa %s19, 0
    loop: start=0, step=1, limit=4
    $region2: #{tpu_custom_call.1} parent=1 // loop_pre_header
      _
    $region3: #{tpu_custom_call.1} parent=1 // loop_header
      %s22 = sphi 0, %s26
      %p23 = scmp.ge.s32.totalorder %s22, 4
      %s32 = sphi 0, %s34
      %s35 = sphi 0, %s32
      %s36 = sphi 0, %s35
      %s52 = sphi 0, %s36
      %s56 = sphi 0, %s56
      %s58 = sphi 0, %s56
      %s59 = sphi 0, %s58
      %s73 = sphi 0, %s59
      %s77 = sphi 0, %s77
      %s79 = sphi 0, %s77
      %s80 = sphi 0, %s79
      %s94 = sphi 0, %s80
      %s98 = sphi 0, %s98
      %s100 = sphi 0, %s98
      %s101 = sphi 0, %s100
      %s115 = sphi 0, %s101
      %s119 = sphi 0, %s119
      %s121 = sphi 0, %s119
      %s122 = sphi 0, %s121
      %s136 = sphi 0, %s122
      %s140 = sphi 0, %s140
      %s142 = sphi 0, %s140
      %s143 = sphi 0, %s142
      %s157 = sphi 0, %s143
      %s161 = sphi 0, %s161
      %s163 = sphi 0, %s161
      %s164 = sphi 0, %s163
      %s178 = sphi 0, %s164
      %s182 = sphi 0, %s182
      %s184 = sphi 0, %s182
      %s185 = sphi 0, %s184
      %s199 = sphi 0, %s185
      %s203 = sphi 0, %s203
      %s205 = sphi 0, %s203
      %s206 = sphi 0, %s205
      %s220 = sphi 0, %s206
      %s224 = sphi 0, %s224
      %s226 = sphi 0, %s224
      %s227 = sphi 0, %s226
      %s241 = sphi 0, %s227
      %s245 = sphi 0, %s245
      %s247 = sphi 0, %s245
      %s248 = sphi 0, %s247
      %s262 = sphi 0, %s248
      %s266 = sphi 0, %s266
      %s268 = sphi 0, %s266
      %s269 = sphi 0, %s268
      %s283 = sphi 0, %s269
      %s287 = sphi 0, %s287
      %s289 = sphi 0, %s287
      %s290 = sphi 0, %s289
      %s304 = sphi 0, %s290
      %s310 = sphi 0, %s312
      %s313 = sphi 0, %s310
      %s314 = sphi 0, %s313
      %s330 = sphi 0, %s314
    $region4: #{tpu_custom_call.1} parent=1 // loop_header_branch
      %25 = sbr.rel (%p23) target = $region8
    $region5: #{tpu_custom_call.1} parent=1 // loop_body
      %s27 = ssub.s32 %s22, 1
      %s28 = ssub.s32 %s22, 2
      %s29 = sadd.s32 %s22, 1
      %s30 = ssub.s32 %s22, %s29
      %p31 = scmp.eq.s32.totalorder %s30, 0
      %s33 = sadd.s32 %s32, 1
      %s34 = scalar_select %p31, %s32, %s33
      %p37 = pneg %p31
      %p38 = scmp.eq.s32.totalorder %s22, 1
      %p39 = por %p37, %p38
      %p40 = scmp.ne.s32.totalorder %s32, %s35
      %p41 = scmp.eq.s32.totalorder %s22, 0
      %p42 = por %p40, %p41
      %p43 = scmp.ne.s32.totalorder %s32, %s35
      %p44 = scmp.eq.s32.totalorder %s27, 1
      %p45 = por %p43, %p44
      %p46 = scmp.ne.s32.totalorder %s35, %s36
      %p47 = scmp.eq.s32.totalorder %s27, 0
      %p48 = por %p46, %p47
      %p49 = scmp.ne.s32.totalorder %s35, %s36
      %p50 = scmp.eq.s32.totalorder %s28, 1
      %p51 = por %p49, %p50
      %p53 = scmp.ne.s32.totalorder %s36, %s52
      %p54 = scmp.eq.s32.totalorder %s28, 0
      %p55 = por %p53, %p54
      %s57 = sadd.s32 %s56, 1
      %p60 = scmp.eq.s32.totalorder %s22, 1
      %p61 = scmp.ne.s32.totalorder %s56, %s58
      %p62 = scmp.eq.s32.totalorder %s22, 0
      %p63 = por %p61, %p62
      %p64 = scmp.ne.s32.totalorder %s56, %s58
      %p65 = scmp.eq.s32.totalorder %s27, 1
      %p66 = por %p64, %p65
      %p67 = scmp.ne.s32.totalorder %s58, %s59
      %p68 = scmp.eq.s32.totalorder %s27, 0
      %p69 = por %p67, %p68
      %p70 = scmp.ne.s32.totalorder %s58, %s59
      %p71 = scmp.eq.s32.totalorder %s28, 1
      %p72 = por %p70, %p71
      %p74 = scmp.ne.s32.totalorder %s59, %s73
      %p75 = scmp.eq.s32.totalorder %s28, 0
      %p76 = por %p74, %p75
      %s78 = sadd.s32 %s77, 1
      %p81 = scmp.eq.s32.totalorder %s22, 1
      %p82 = scmp.ne.s32.totalorder %s77, %s79
      %p83 = scmp.eq.s32.totalorder %s22, 0
      %p84 = por %p82, %p83
      %p85 = scmp.ne.s32.totalorder %s77, %s79
      %p86 = scmp.eq.s32.totalorder %s27, 1
      %p87 = por %p85, %p86
      %p88 = scmp.ne.s32.totalorder %s79, %s80
      %p89 = scmp.eq.s32.totalorder %s27, 0
      %p90 = por %p88, %p89
      %p91 = scmp.ne.s32.totalorder %s79, %s80
      %p92 = scmp.eq.s32.totalorder %s28, 1
      %p93 = por %p91, %p92
      %p95 = scmp.ne.s32.totalorder %s80, %s94
      %p96 = scmp.eq.s32.totalorder %s28, 0
      %p97 = por %p95, %p96
      %s99 = sadd.s32 %s98, 1
      %p102 = scmp.eq.s32.totalorder %s22, 1
      %p103 = scmp.ne.s32.totalorder %s98, %s100
      %p104 = scmp.eq.s32.totalorder %s22, 0
      %p105 = por %p103, %p104
      %p106 = scmp.ne.s32.totalorder %s98, %s100
      %p107 = scmp.eq.s32.totalorder %s27, 1
      %p108 = por %p106, %p107
      %p109 = scmp.ne.s32.totalorder %s100, %s101
      %p110 = scmp.eq.s32.totalorder %s27, 0
      %p111 = por %p109, %p110
      %p112 = scmp.ne.s32.totalorder %s100, %s101
      %p113 = scmp.eq.s32.totalorder %s28, 1
      %p114 = por %p112, %p113
      %p116 = scmp.ne.s32.totalorder %s101, %s115
      %p117 = scmp.eq.s32.totalorder %s28, 0
      %p118 = por %p116, %p117
      %s120 = sadd.s32 %s119, 1
      %p123 = scmp.eq.s32.totalorder %s22, 1
      %p124 = scmp.ne.s32.totalorder %s119, %s121
      %p125 = scmp.eq.s32.totalorder %s22, 0
      %p126 = por %p124, %p125
      %p127 = scmp.ne.s32.totalorder %s119, %s121
      %p128 = scmp.eq.s32.totalorder %s27, 1
      %p129 = por %p127, %p128
      %p130 = scmp.ne.s32.totalorder %s121, %s122
      %p131 = scmp.eq.s32.totalorder %s27, 0
      %p132 = por %p130, %p131
      %p133 = scmp.ne.s32.totalorder %s121, %s122
      %p134 = scmp.eq.s32.totalorder %s28, 1
      %p135 = por %p133, %p134
      %p137 = scmp.ne.s32.totalorder %s122, %s136
      %p138 = scmp.eq.s32.totalorder %s28, 0
      %p139 = por %p137, %p138
      %s141 = sadd.s32 %s140, 1
      %p144 = scmp.eq.s32.totalorder %s22, 1
      %p145 = scmp.ne.s32.totalorder %s140, %s142
      %p146 = scmp.eq.s32.totalorder %s22, 0
      %p147 = por %p145, %p146
      %p148 = scmp.ne.s32.totalorder %s140, %s142
      %p149 = scmp.eq.s32.totalorder %s27, 1
      %p150 = por %p148, %p149
      %p151 = scmp.ne.s32.totalorder %s142, %s143
      %p152 = scmp.eq.s32.totalorder %s27, 0
      %p153 = por %p151, %p152
      %p154 = scmp.ne.s32.totalorder %s142, %s143
      %p155 = scmp.eq.s32.totalorder %s28, 1
      %p156 = por %p154, %p155
      %p158 = scmp.ne.s32.totalorder %s143, %s157
      %p159 = scmp.eq.s32.totalorder %s28, 0
      %p160 = por %p158, %p159
      %s162 = sadd.s32 %s161, 1
      %p165 = scmp.eq.s32.totalorder %s22, 1
      %p166 = scmp.ne.s32.totalorder %s161, %s163
      %p167 = scmp.eq.s32.totalorder %s22, 0
      %p168 = por %p166, %p167
      %p169 = scmp.ne.s32.totalorder %s161, %s163
      %p170 = scmp.eq.s32.totalorder %s27, 1
      %p171 = por %p169, %p170
      %p172 = scmp.ne.s32.totalorder %s163, %s164
      %p173 = scmp.eq.s32.totalorder %s27, 0
      %p174 = por %p172, %p173
      %p175 = scmp.ne.s32.totalorder %s163, %s164
      %p176 = scmp.eq.s32.totalorder %s28, 1
      %p177 = por %p175, %p176
      %p179 = scmp.ne.s32.totalorder %s164, %s178
      %p180 = scmp.eq.s32.totalorder %s28, 0
      %p181 = por %p179, %p180
      %s183 = sadd.s32 %s182, 1
      %p186 = scmp.eq.s32.totalorder %s22, 1
      %p187 = scmp.ne.s32.totalorder %s182, %s184
      %p188 = scmp.eq.s32.totalorder %s22, 0
      %p189 = por %p187, %p188
      %p190 = scmp.ne.s32.totalorder %s182, %s184
      %p191 = scmp.eq.s32.totalorder %s27, 1
      %p192 = por %p190, %p191
      %p193 = scmp.ne.s32.totalorder %s184, %s185
      %p194 = scmp.eq.s32.totalorder %s27, 0
      %p195 = por %p193, %p194
      %p196 = scmp.ne.s32.totalorder %s184, %s185
      %p197 = scmp.eq.s32.totalorder %s28, 1
      %p198 = por %p196, %p197
      %p200 = scmp.ne.s32.totalorder %s185, %s199
      %p201 = scmp.eq.s32.totalorder %s28, 0
      %p202 = por %p200, %p201
      %s204 = sadd.s32 %s203, 1
      %p207 = scmp.eq.s32.totalorder %s22, 1
      %p208 = scmp.ne.s32.totalorder %s203, %s205
      %p209 = scmp.eq.s32.totalorder %s22, 0
      %p210 = por %p208, %p209
      %p211 = scmp.ne.s32.totalorder %s203, %s205
      %p212 = scmp.eq.s32.totalorder %s27, 1
      %p213 = por %p211, %p212
      %p214 = scmp.ne.s32.totalorder %s205, %s206
      %p215 = scmp.eq.s32.totalorder %s27, 0
      %p216 = por %p214, %p215
      %p217 = scmp.ne.s32.totalorder %s205, %s206
      %p218 = scmp.eq.s32.totalorder %s28, 1
      %p219 = por %p217, %p218
      %p221 = scmp.ne.s32.totalorder %s206, %s220
      %p222 = scmp.eq.s32.totalorder %s28, 0
      %p223 = por %p221, %p222
      %s225 = sadd.s32 %s224, 1
      %p228 = scmp.eq.s32.totalorder %s22, 1
      %p229 = scmp.ne.s32.totalorder %s224, %s226
      %p230 = scmp.eq.s32.totalorder %s22, 0
      %p231 = por %p229, %p230
      %p232 = scmp.ne.s32.totalorder %s224, %s226
      %p233 = scmp.eq.s32.totalorder %s27, 1
      %p234 = por %p232, %p233
      %p235 = scmp.ne.s32.totalorder %s226, %s227
      %p236 = scmp.eq.s32.totalorder %s27, 0
      %p237 = por %p235, %p236
      %p238 = scmp.ne.s32.totalorder %s226, %s227
      %p239 = scmp.eq.s32.totalorder %s28, 1
      %p240 = por %p238, %p239
      %p242 = scmp.ne.s32.totalorder %s227, %s241
      %p243 = scmp.eq.s32.totalorder %s28, 0
      %p244 = por %p242, %p243
      %s246 = sadd.s32 %s245, 1
      %p249 = scmp.eq.s32.totalorder %s22, 1
      %p250 = scmp.ne.s32.totalorder %s245, %s247
      %p251 = scmp.eq.s32.totalorder %s22, 0
      %p252 = por %p250, %p251
      %p253 = scmp.ne.s32.totalorder %s245, %s247
      %p254 = scmp.eq.s32.totalorder %s27, 1
      %p255 = por %p253, %p254
      %p256 = scmp.ne.s32.totalorder %s247, %s248
      %p257 = scmp.eq.s32.totalorder %s27, 0
      %p258 = por %p256, %p257
      %p259 = scmp.ne.s32.totalorder %s247, %s248
      %p260 = scmp.eq.s32.totalorder %s28, 1
      %p261 = por %p259, %p260
      %p263 = scmp.ne.s32.totalorder %s248, %s262
      %p264 = scmp.eq.s32.totalorder %s28, 0
      %p265 = por %p263, %p264
      %s267 = sadd.s32 %s266, 1
      %p270 = scmp.eq.s32.totalorder %s22, 1
      %p271 = scmp.ne.s32.totalorder %s266, %s268
      %p272 = scmp.eq.s32.totalorder %s22, 0
      %p273 = por %p271, %p272
      %p274 = scmp.ne.s32.totalorder %s266, %s268
      %p275 = scmp.eq.s32.totalorder %s27, 1
      %p276 = por %p274, %p275
      %p277 = scmp.ne.s32.totalorder %s268, %s269
      %p278 = scmp.eq.s32.totalorder %s27, 0
      %p279 = por %p277, %p278
      %p280 = scmp.ne.s32.totalorder %s268, %s269
      %p281 = scmp.eq.s32.totalorder %s28, 1
      %p282 = por %p280, %p281
      %p284 = scmp.ne.s32.totalorder %s269, %s283
      %p285 = scmp.eq.s32.totalorder %s28, 0
      %p286 = por %p284, %p285
      %s288 = sadd.s32 %s287, 1
      %p291 = scmp.eq.s32.totalorder %s22, 1
      %p292 = scmp.ne.s32.totalorder %s287, %s289
      %p293 = scmp.eq.s32.totalorder %s22, 0
      %p294 = por %p292, %p293
      %p295 = scmp.ne.s32.totalorder %s287, %s289
      %p296 = scmp.eq.s32.totalorder %s27, 1
      %p297 = por %p295, %p296
      %p298 = scmp.ne.s32.totalorder %s289, %s290
      %p299 = scmp.eq.s32.totalorder %s27, 0
      %p300 = por %p298, %p299
      %p301 = scmp.ne.s32.totalorder %s289, %s290
      %p302 = scmp.eq.s32.totalorder %s28, 1
      %p303 = por %p301, %p302
      %p305 = scmp.ne.s32.totalorder %s290, %s304
      %p306 = scmp.eq.s32.totalorder %s28, 0
      %p307 = por %p305, %p306
      %s308 = ssub.s32 %s22, %s29
      %p309 = scmp.eq.s32.totalorder %s308, 0
      %s311 = sadd.s32 %s310, 1
      %s312 = scalar_select %p309, %s310, %s311
      %p315 = pneg %p309
      %p316 = scmp.eq.s32.totalorder %s22, 1
      %p317 = por %p315, %p316
      %p318 = scmp.ne.s32.totalorder %s310, %s313
      %p319 = scmp.eq.s32.totalorder %s22, 0
      %p320 = por %p318, %p319
      %p321 = scmp.ne.s32.totalorder %s310, %s313
      %p322 = scmp.eq.s32.totalorder %s27, 1
      %p323 = por %p321, %p322
      %p324 = scmp.ne.s32.totalorder %s313, %s314
      %p325 = scmp.eq.s32.totalorder %s27, 0
      %p326 = por %p324, %p325
      %p327 = scmp.ne.s32.totalorder %s313, %s314
      %p328 = scmp.eq.s32.totalorder %s28, 1
      %p329 = por %p327, %p328
      %p331 = scmp.ne.s32.totalorder %s314, %s330
      %p332 = scmp.eq.s32.totalorder %s28, 0
      %p333 = por %p331, %p332
      %p334 = scmp.le.s32.totalorder 1, %s22
      %p335 = scmp.lt.s32.totalorder %s22, 3
      %p336 = pnand %p334, %p335
      %p337 = pneg %p336
      // Predicated region
      $region9: #{tpu_custom_call.1} parent=5 // pred_check
        _
      $region10: #{tpu_custom_call.1} parent=5 // pred_check_branch
        %339 = sbr.rel (%p336) target = $region12
      $region11: #{tpu_custom_call.1} parent=5 // pred_region
        %s340 = ssub.s32 %s22, 1
        // Predicated region
        $region13: #{tpu_custom_call.1} parent=11 // pred_check
          %p341 = pneg %p69
        $region14: #{tpu_custom_call.1} parent=11 // pred_check_branch
          %343 = sbr.rel (%p341) target = $region16
        $region15: #{tpu_custom_call.1} parent=11 // pred_region
          _
        $region16: #{tpu_custom_call.1} parent=11 // pred_fallthru
          _
        // Predicated region
        $region17: #{tpu_custom_call.1} parent=11 // pred_check
          %p344 = pneg %p90
        $region18: #{tpu_custom_call.1} parent=11 // pred_check_branch
          %346 = sbr.rel (%p344) target = $region20
        $region19: #{tpu_custom_call.1} parent=11 // pred_region
          _
        $region20: #{tpu_custom_call.1} parent=11 // pred_fallthru
          _
        // Predicated region
        $region21: #{tpu_custom_call.1} parent=11 // pred_check
          %p347 = pneg %p111
        $region22: #{tpu_custom_call.1} parent=11 // pred_check_branch
          %349 = sbr.rel (%p347) target = $region24
        $region23: #{tpu_custom_call.1} parent=11 // pred_region
          _
        $region24: #{tpu_custom_call.1} parent=11 // pred_fallthru
          _
        // Predicated region
        $region25: #{tpu_custom_call.1} parent=11 // pred_check
          %p350 = pneg %p132
        $region26: #{tpu_custom_call.1} parent=11 // pred_check_branch
          %352 = sbr.rel (%p350) target = $region28
        $region27: #{tpu_custom_call.1} parent=11 // pred_region
          _
        $region28: #{tpu_custom_call.1} parent=11 // pred_fallthru
          _
        // Predicated region
        $region29: #{tpu_custom_call.1} parent=11 // pred_check
          %p353 = pneg %p153
        $region30: #{tpu_custom_call.1} parent=11 // pred_check_branch
          %355 = sbr.rel (%p353) target = $region32
        $region31: #{tpu_custom_call.1} parent=11 // pred_region
          _
        $region32: #{tpu_custom_call.1} parent=11 // pred_fallthru
          _
        // Predicated region
        $region33: #{tpu_custom_call.1} parent=11 // pred_check
          %p356 = pneg %p174
        $region34: #{tpu_custom_call.1} parent=11 // pred_check_branch
          %358 = sbr.rel (%p356) target = $region36
        $region35: #{tpu_custom_call.1} parent=11 // pred_region
          _
        $region36: #{tpu_custom_call.1} parent=11 // pred_fallthru
          _
        // Predicated region
        $region37: #{tpu_custom_call.1} parent=11 // pred_check
          %p359 = pneg %p195
        $region38: #{tpu_custom_call.1} parent=11 // pred_check_branch
          %361 = sbr.rel (%p359) target = $region40
        $region39: #{tpu_custom_call.1} parent=11 // pred_region
          _
        $region40: #{tpu_custom_call.1} parent=11 // pred_fallthru
          _
        // Predicated region
        $region41: #{tpu_custom_call.1} parent=11 // pred_check
          %p362 = pneg %p216
        $region42: #{tpu_custom_call.1} parent=11 // pred_check_branch
          %364 = sbr.rel (%p362) target = $region44
        $region43: #{tpu_custom_call.1} parent=11 // pred_region
          _
        $region44: #{tpu_custom_call.1} parent=11 // pred_fallthru
          _
        // Predicated region
        $region45: #{tpu_custom_call.1} parent=11 // pred_check
          %p365 = pneg %p237
        $region46: #{tpu_custom_call.1} parent=11 // pred_check_branch
          %367 = sbr.rel (%p365) target = $region48
        $region47: #{tpu_custom_call.1} parent=11 // pred_region
          _
        $region48: #{tpu_custom_call.1} parent=11 // pred_fallthru
          _
        // Predicated region
        $region49: #{tpu_custom_call.1} parent=11 // pred_check
          %p368 = pneg %p258
        $region50: #{tpu_custom_call.1} parent=11 // pred_check_branch
          %370 = sbr.rel (%p368) target = $region52
        $region51: #{tpu_custom_call.1} parent=11 // pred_region
          _
        $region52: #{tpu_custom_call.1} parent=11 // pred_fallthru
          _
        // Predicated region
        $region53: #{tpu_custom_call.1} parent=11 // pred_check
          %p371 = pneg %p279
        $region54: #{tpu_custom_call.1} parent=11 // pred_check_branch
          %373 = sbr.rel (%p371) target = $region56
        $region55: #{tpu_custom_call.1} parent=11 // pred_region
          _
        $region56: #{tpu_custom_call.1} parent=11 // pred_fallthru
          _
        // Predicated region
        $region57: #{tpu_custom_call.1} parent=11 // pred_check
          %p374 = pneg %p300
        $region58: #{tpu_custom_call.1} parent=11 // pred_check_branch
          %376 = sbr.rel (%p374) target = $region60
        $region59: #{tpu_custom_call.1} parent=11 // pred_region
          _
        $region60: #{tpu_custom_call.1} parent=11 // pred_fallthru
          _
      $region12: #{tpu_custom_call.1} parent=5 // pred_fallthru
        _
      %p377 = scmp.lt.s32.totalorder %s22, 2
      // Predicated region
      $region61: #{tpu_custom_call.1} parent=5 // pred_check
        %p378 = pneg %p377
      $region62: #{tpu_custom_call.1} parent=5 // pred_check_branch
        %380 = sbr.rel (%p378) target = $region64
      $region63: #{tpu_custom_call.1} parent=5 // pred_region
        // Predicated region
        $region65: #{tpu_custom_call.1} parent=63 // pred_check
          %p381 = pneg %p42
        $region66: #{tpu_custom_call.1} parent=63 // pred_check_branch
          %383 = sbr.rel (%p381) target = $region68
        $region67: #{tpu_custom_call.1} parent=63 // pred_region
          %p384 = scmp.lt.s32.totalorder %s22, 1
          %s385 = scalar_select %p384, %s22, 1
          %s386 = smul.addr %s385, 8
          %s387 = scalar_lea.vmem %s0, %s386
        $region68: #{tpu_custom_call.1} parent=63 // pred_fallthru
          _
      $region64: #{tpu_custom_call.1} parent=5 // pred_fallthru
        _
      %p388 = scmp.le.s32.totalorder 1, %s22
      %p389 = scmp.lt.s32.totalorder %s22, 3
      %p390 = pnand %p388, %p389
      %p391 = pneg %p390
      // Predicated region
      $region69: #{tpu_custom_call.1} parent=5 // pred_check
        _
      $region70: #{tpu_custom_call.1} parent=5 // pred_check_branch
        %393 = sbr.rel (%p390) target = $region72
      $region71: #{tpu_custom_call.1} parent=5 // pred_region
        %s394 = ssub.s32 %s22, 1
        %p395 = scmp.lt.s32.totalorder %s27, 1
        %s396 = scalar_select %p395, %s27, 1
        %s397 = smul.addr %s396, 8
        %s398 = scalar_lea.vmem %s0, %s397
        %p399 = pneg %p48
        %p400 = pneg %p45
        %p401 = pneg %p69
        %p402 = pneg %p66
        %p403 = pneg %p90
        %p404 = pneg %p87
        %p405 = pneg %p111
        %p406 = pneg %p108
        %p407 = pneg %p132
        %p408 = pneg %p129
        %p409 = pneg %p153
        %p410 = pneg %p150
        %p411 = pneg %p174
        %p412 = pneg %p171
        %p413 = pneg %p195
        %p414 = pneg %p192
        %p415 = pneg %p216
        %p416 = pneg %p213
        %p417 = pneg %p237
        %p418 = pneg %p234
        %p419 = pneg %p258
        %p420 = pneg %p255
        %p421 = pneg %p279
        %p422 = pneg %p276
        %p423 = pneg %p300
        %p424 = pneg %p297
        %p425 = pneg %p326
        %p426 = pneg %p323
        %s427 = sand.u32 %s313, 1
        %s428 = scalar_lea.sflag [#allocation4], %s427
        %s429 = sand.u32 %s313, 1
        %s430 = smul.addr %s429, 8
        %s431 = scalar_lea.vmem [#allocation3], %s430
        %p432 = scmp.lt.s32.totalorder %s27, 1
        %s433 = scalar_select %p432, %s27, 1
        %s434 = smul.addr %s433, 8
        %s435 = scalar_lea.vmem %s0, %s434
        %v437 = vld [vmem:[%s435] sm:$0xff]
        %v438 = vld [vmem:[%s1] sm:$0x1]
        %v439 = vld [vmem:[%s2] sm:$0x1]
        %vm440 = vcmask 261120
        %v441 = vsel %vm440, %v437, 0.0
        %442 = vadd.xlane.f32.xlu0 %v441
        %v443 = vpop.xlane.xlu0 %442
        %v444 = vrcp.pop 32.0
        %v445 = vmul.f32 %v443, %v444
        %v446 = vsub.f32 %v437, %v445
        %v447 = vmul.f32 %v446, %v446
        %v448 = vsel %vm440, %v447, 0.0
        %449 = vadd.xlane.f32.xlu0 %v448
        %v450 = vpop.xlane.xlu0 %449
        %v451 = vmul.f32 %v450, %v444
        %v452 = vadd.f32 %v451, 1e-05
        %v453 = vrsqrt.pop %v452
        %v454 = vmul.f32 %v446, %v453
        %v456 = vlaneseq
        %v457 = vshrl.u32 %v456, 7
        %v458 = vsub.s32 0, %v457
        %v459 = vrot.slane %v438, %v458
        %v461 = vmul.f32 %v454, %v459
        %v463 = vlaneseq
        %v464 = vshrl.u32 %v463, 7
        %v465 = vsub.s32 0, %v464
        %v466 = vrot.slane %v439, %v465
        %v468 = vadd.f32 %v461, %v466
        %v469 = vpack.c.bf16 %v468, %v468
        %v470 = vld [vmem:[%s3] sm:$0xf]
        %v471 = vld [vmem:[%s3 + $0x4] sm:$0xf]
        %v472 = vld [vmem:[%s3 + $0x8] sm:$0xf]
        %v473 = vld [vmem:[%s3 + $0xc] sm:$0xf]
        %v474 = vld [vmem:[%s4] sm:$0x1]
        %v476 = vlaneseq
        %v477 = vshrl.u32 %v476, 7
        %v478 = vsub.s32 0, %v477
        %v479 = vrot.slane %v474, %v478
        %v485 = vunpack.c.l.b16 %v470
        %v486 = vunpack.c.l.b16 %v471
        %v487 = vunpack.c.l.b16 %v472
        %v488 = vunpack.c.l.b16 %v473
        %v489 = vpack.c.b16 %v486, %v485
        %v490 = vpack.c.b16 %v488, %v487
        %v494 = vsel %vm440, %v469, 0
        %496 = vmatprep.subr.bf16.mxu0 0
        %497 = vmatpush1.bf16.msra.mxu0 %v489
        %498 = vmatprep.subr.bf16.mxu0 0
        %499 = vmatpush1.bf16.msra.mxu0 %v490
        %500 = vmatprep.subr.bf16.mxu0 0
        %501 = vmatpush1.bf16.msra.mxu0 0
        %502 = vmatprep.subr.bf16.mxu0 0
        %503 = vmatpush1.bf16.msra.mxu0 0
        %504 = vmatprep.subr.bf16.mxu0 0
        %505 = vmatpush1.bf16.msra.mxu0 0
        %506 = vmatprep.subr.bf16.mxu0 0
        %507 = vmatpush1.bf16.msra.mxu0 0
        %508 = vmatprep.subr.bf16.mxu0 0
        %509 = vmatpush1.bf16.msra.mxu0 0
        %510 = vmatprep.subr.bf16.mxu0 0
        %511 = vmatpush1.bf16.msra.mxu0 0
        %512 = vmatprep.subr.bf16.mxu0 0
        %513 = vmatpush1.bf16.msra.mxu0 0
        %514 = vmatprep.subr.bf16.mxu0 0
        %515 = vmatpush1.bf16.msra.mxu0 0
        %516 = vmatprep.subr.bf16.mxu0 0
        %517 = vmatpush1.bf16.msra.mxu0 0
        %518 = vmatprep.subr.bf16.mxu0 0
        %519 = vmatpush1.bf16.msra.mxu0 0
        %520 = vmatprep.subr.bf16.mxu0 0
        %521 = vmatpush1.bf16.msra.mxu0 0
        %522 = vmatprep.subr.bf16.mxu0 0
        %523 = vmatpush1.bf16.msra.mxu0 0
        %524 = vmatprep.subr.bf16.mxu0 0
        %525 = vmatpush1.bf16.msra.mxu0 0
        %526 = vmatprep.subr.bf16.mxu0 0
        %527 = vmatpush1.bf16.msra.mxu0 0
        %528 = vmatprep.mubr.bf16.mxu0 0
        %529 = vmatmul.mubr.bf16.gmra.mrb[0].mxu0 %v494
        %v530 = vpop.f32.mrb[0].mxu0
        %v531 = vadd.f32 %v479, %v530
        %v532 = vpop.f32.mrb[0].mxu0
        %v533 = vpop.f32.mrb[0].mxu0
        %v534 = vpop.f32.mrb[0].mxu0
        %535 = vdwg.mxu0
        %v536 = vpack.c.bf16 %v531, %v531
        %538 = vrot.lane.b32.xlu0 %v536, 96
        %v539 = vpop.permute.xlu0 %538
        %vm540 = vcmask 64512
        %v542 = vsel %vm540, %v536, 0
        %v545 = vsel %vm540, %v539, 0
        %547 = vmatprep.subr.bf16.mxu0 0
        %548 = vmatpush1.bf16.xpose.msra.mxu0 %v545
        %549 = vmatprep.subr.bf16.mxu0 0
        %550 = vmatpush1.bf16.xpose.msra.mxu0 0
        %551 = vmatprep.subr.bf16.mxu0 0
        %552 = vmatpush1.bf16.xpose.msra.mxu0 0
        %553 = vmatprep.subr.bf16.mxu0 0
        %554 = vmatpush1.bf16.xpose.msra.mxu0 0
        %555 = vmatprep.subr.bf16.mxu0 0
        %556 = vmatpush1.bf16.xpose.msra.mxu0 0
        %557 = vmatprep.subr.bf16.mxu0 0
        %558 = vmatpush1.bf16.xpose.msra.mxu0 0
        %559 = vmatprep.subr.bf16.mxu0 0
        %560 = vmatpush1.bf16.xpose.msra.mxu0 0
        %561 = vmatprep.subr.bf16.mxu0 0
        %562 = vmatpush1.bf16.xpose.msra.mxu0 0
        %563 = vmatprep.subr.bf16.mxu0 0
        %564 = vmatpush1.bf16.xpose.msra.mxu0 0
        %565 = vmatprep.subr.bf16.mxu0 0
        %566 = vmatpush1.bf16.xpose.msra.mxu0 0
        %567 = vmatprep.subr.bf16.mxu0 0
        %568 = vmatpush1.bf16.xpose.msra.mxu0 0
        %569 = vmatprep.subr.bf16.mxu0 0
        %570 = vmatpush1.bf16.xpose.msra.mxu0 0
        %571 = vmatprep.subr.bf16.mxu0 0
        %572 = vmatpush1.bf16.xpose.msra.mxu0 0
        %573 = vmatprep.subr.bf16.mxu0 0
        %574 = vmatpush1.bf16.xpose.msra.mxu0 0
        %575 = vmatprep.subr.bf16.mxu0 0
        %576 = vmatpush1.bf16.xpose.msra.mxu0 0
        %577 = vmatprep.subr.bf16.mxu0 0
        %578 = vmatpush1.bf16.xpose.msra.mxu0 0
        %579 = vmatprep.mubr.bf16.mxu0 0
        %580 = vmatmul.mubr.bf16.gmra.mrb[0].mxu0 %v542
        %v581 = vpop.f32.mrb[0].mxu0
        %v582 = vadd.f32 0.0, %v581
        %v583 = vpop.f32.mrb[0].mxu0
        %v584 = vpop.f32.mrb[0].mxu0
        %v585 = vpop.f32.mrb[0].mxu0
        %586 = vdwg.mxu0
        %v587 = vsel %vm540, %v582, -inf
        %588 = vmax.xlane.f32.xlu0 %v587
        %v589 = vpop.xlane.xlu0 %588
        %v590 = vsub.f32 %v582, %v589
        %v591 = vmul.f32 %v590, 1.442695
        %v592 = vpow.pop %v591
        %v593 = vsel %vm540, %v592, 0.0
        %594 = vadd.xlane.f32.xlu0 %v593
        %v595 = vpop.xlane.xlu0 %594
        %v596 = vrcp.pop %v595
        %v597 = vmul.f32 %v592, %v596
        %v598 = vpack.c.bf16 %v597, %v597
        %599 = vrot.lane.b32.xlu0 %v536, 64
        %v600 = vpop.permute.xlu0 %599
        %v602 = vsel %vm540, %v598, 0
        %vm604 = vcmask 1043456
        %v606 = vsel %vm604, %v600, 0
        %608 = vmatprep.subr.bf16.mxu0 0
        %609 = vmatpush1.bf16.msra.mxu0 %v606
        %610 = vmatprep.subr.bf16.mxu0 0
        %611 = vmatpush1.bf16.msra.mxu0 0
        %612 = vmatprep.subr.bf16.mxu0 0
        %613 = vmatpush1.bf16.msra.mxu0 0
        %614 = vmatprep.subr.bf16.mxu0 0
        %615 = vmatpush1.bf16.msra.mxu0 0
        %616 = vmatprep.subr.bf16.mxu0 0
        %617 = vmatpush1.bf16.msra.mxu0 0
        %618 = vmatprep.subr.bf16.mxu0 0
        %619 = vmatpush1.bf16.msra.mxu0 0
        %620 = vmatprep.subr.bf16.mxu0 0
        %621 = vmatpush1.bf16.msra.mxu0 0
        %622 = vmatprep.subr.bf16.mxu0 0
        %623 = vmatpush1.bf16.msra.mxu0 0
        %624 = vmatprep.subr.bf16.mxu0 0
        %625 = vmatpush1.bf16.msra.mxu0 0
        %626 = vmatprep.subr.bf16.mxu0 0
        %627 = vmatpush1.bf16.msra.mxu0 0
        %628 = vmatprep.subr.bf16.mxu0 0
        %629 = vmatpush1.bf16.msra.mxu0 0
        %630 = vmatprep.subr.bf16.mxu0 0
        %631 = vmatpush1.bf16.msra.mxu0 0
        %632 = vmatprep.subr.bf16.mxu0 0
        %633 = vmatpush1.bf16.msra.mxu0 0
        %634 = vmatprep.subr.bf16.mxu0 0
        %635 = vmatpush1.bf16.msra.mxu0 0
        %636 = vmatprep.subr.bf16.mxu0 0
        %637 = vmatpush1.bf16.msra.mxu0 0
        %638 = vmatprep.subr.bf16.mxu0 0
        %639 = vmatpush1.bf16.msra.mxu0 0
        %640 = vmatprep.mubr.bf16.mxu0 0
        %641 = vmatmul.mubr.bf16.gmra.mrb[0].mxu0 %v602
        %v642 = vpop.f32.mrb[0].mxu0
        %v643 = vadd.f32 0.0, %v642
        %v644 = vpop.f32.mrb[0].mxu0
        %v645 = vpop.f32.mrb[0].mxu0
        %v646 = vpop.f32.mrb[0].mxu0
        %647 = vdwg.mxu0
        %v648 = vpack.c.bf16 %v643, %v643
        %vm649 = vcmask 60416
        %650 = vst.msk [vmem:[#allocation2] sm:$0xf] %vm649, %v648
        %651 = vrot.lane.b32.xlu0 %v536, 120
        %v652 = vpop.permute.xlu0 %651
        %653 = vrot.lane.b32.xlu0 %v536, 88
        %v654 = vpop.permute.xlu0 %653
        %v656 = vsel %vm540, %v652, 0
        %v659 = vsel %vm540, %v654, 0
        %661 = vmatprep.subr.bf16.mxu0 0
        %662 = vmatpush1.bf16.xpose.msra.mxu0 %v659
        %663 = vmatprep.subr.bf16.mxu0 0
        %664 = vmatpush1.bf16.xpose.msra.mxu0 0
        %665 = vmatprep.subr.bf16.mxu0 0
        %666 = vmatpush1.bf16.xpose.msra.mxu0 0
        %667 = vmatprep.subr.bf16.mxu0 0
        %668 = vmatpush1.bf16.xpose.msra.mxu0 0
        %669 = vmatprep.subr.bf16.mxu0 0
        %670 = vmatpush1.bf16.xpose.msra.mxu0 0
        %671 = vmatprep.subr.bf16.mxu0 0
        %672 = vmatpush1.bf16.xpose.msra.mxu0 0
        %673 = vmatprep.subr.bf16.mxu0 0
        %674 = vmatpush1.bf16.xpose.msra.mxu0 0
        %675 = vmatprep.subr.bf16.mxu0 0
        %676 = vmatpush1.bf16.xpose.msra.mxu0 0
        %677 = vmatprep.subr.bf16.mxu0 0
        %678 = vmatpush1.bf16.xpose.msra.mxu0 0
        %679 = vmatprep.subr.bf16.mxu0 0
        %680 = vmatpush1.bf16.xpose.msra.mxu0 0
        %681 = vmatprep.subr.bf16.mxu0 0
        %682 = vmatpush1.bf16.xpose.msra.mxu0 0
        %683 = vmatprep.subr.bf16.mxu0 0
        %684 = vmatpush1.bf16.xpose.msra.mxu0 0
        %685 = vmatprep.subr.bf16.mxu0 0
        %686 = vmatpush1.bf16.xpose.msra.mxu0 0
        %687 = vmatprep.subr.bf16.mxu0 0
        %688 = vmatpush1.bf16.xpose.msra.mxu0 0
        %689 = vmatprep.subr.bf16.mxu0 0
        %690 = vmatpush1.bf16.xpose.msra.mxu0 0
        %691 = vmatprep.subr.bf16.mxu0 0
        %692 = vmatpush1.bf16.xpose.msra.mxu0 0
        %693 = vmatprep.mubr.bf16.mxu0 0
        %694 = vmatmul.mubr.bf16.gmra.mrb[0].mxu0 %v656
        %v695 = vpop.f32.mrb[0].mxu0
        %v696 = vadd.f32 0.0, %v695
        %v697 = vpop.f32.mrb[0].mxu0
        %v698 = vpop.f32.mrb[0].mxu0
        %v699 = vpop.f32.mrb[0].mxu0
        %700 = vdwg.mxu0
        %v701 = vsel %vm540, %v696, -inf
        %702 = vmax.xlane.f32.xlu0 %v701
        %v703 = vpop.xlane.xlu0 %702
        %v704 = vsub.f32 %v696, %v703
        %v705 = vmul.f32 %v704, 1.442695
        %v706 = vpow.pop %v705
        %v707 = vsel %vm540, %v706, 0.0
        %708 = vadd.xlane.f32.xlu0 %v707
        %v709 = vpop.xlane.xlu0 %708
        %v710 = vrcp.pop %v709
        %v711 = vmul.f32 %v706, %v710
        %v712 = vpack.c.bf16 %v711, %v711
        %713 = vrot.lane.b32.xlu0 %v536, 56
        %v714 = vpop.permute.xlu0 %713
        %v716 = vsel %vm540, %v712, 0
        %v719 = vsel %vm604, %v714, 0
        %721 = vmatprep.subr.bf16.mxu0 0
        %722 = vmatpush1.bf16.msra.mxu0 %v719
        %723 = vmatprep.subr.bf16.mxu0 0
        %724 = vmatpush1.bf16.msra.mxu0 0
        %725 = vmatprep.subr.bf16.mxu0 0
        %726 = vmatpush1.bf16.msra.mxu0 0
        %727 = vmatprep.subr.bf16.mxu0 0
        %728 = vmatpush1.bf16.msra.mxu0 0
        %729 = vmatprep.subr.bf16.mxu0 0
        %730 = vmatpush1.bf16.msra.mxu0 0
        %731 = vmatprep.subr.bf16.mxu0 0
        %732 = vmatpush1.bf16.msra.mxu0 0
        %733 = vmatprep.subr.bf16.mxu0 0
        %734 = vmatpush1.bf16.msra.mxu0 0
        %735 = vmatprep.subr.bf16.mxu0 0
        %736 = vmatpush1.bf16.msra.mxu0 0
        %737 = vmatprep.subr.bf16.mxu0 0
        %738 = vmatpush1.bf16.msra.mxu0 0
        %739 = vmatprep.subr.bf16.mxu0 0
        %740 = vmatpush1.bf16.msra.mxu0 0
        %741 = vmatprep.subr.bf16.mxu0 0
        %742 = vmatpush1.bf16.msra.mxu0 0
        %743 = vmatprep.subr.bf16.mxu0 0
        %744 = vmatpush1.bf16.msra.mxu0 0
        %745 = vmatprep.subr.bf16.mxu0 0
        %746 = vmatpush1.bf16.msra.mxu0 0
        %747 = vmatprep.subr.bf16.mxu0 0
        %748 = vmatpush1.bf16.msra.mxu0 0
        %749 = vmatprep.subr.bf16.mxu0 0
        %750 = vmatpush1.bf16.msra.mxu0 0
        %751 = vmatprep.subr.bf16.mxu0 0
        %752 = vmatpush1.bf16.msra.mxu0 0
        %753 = vmatprep.mubr.bf16.mxu0 0
        %754 = vmatmul.mubr.bf16.gmra.mrb[0].mxu0 %v716
        %v755 = vpop.f32.mrb[0].mxu0
        %v756 = vadd.f32 0.0, %v755
        %v757 = vpop.f32.mrb[0].mxu0
        %v758 = vpop.f32.mrb[0].mxu0
        %v759 = vpop.f32.mrb[0].mxu0
        %760 = vdwg.mxu0
        %v761 = vpack.c.bf16 %v756, %v756
        %v763 = vunpack.c.l.b16 %v761
        %v764 = vpack.c.b16 %v763, %v763
        %765 = vrot.lane.b32.xlu0 %v764, 8
        %v766 = vpop.permute.xlu0 %765
        %vm768 = vcmask 126016
        %769 = vst.msk [vmem:[#allocation2] sm:$0xf] %vm768, %v766
        %770 = vrot.lane.b32.xlu0 %v536, 112
        %v771 = vpop.permute.xlu0 %770
        %772 = vrot.lane.b32.xlu0 %v536, 80
        %v773 = vpop.permute.xlu0 %772
        %v775 = vsel %vm540, %v771, 0
        %v778 = vsel %vm540, %v773, 0
        %780 = vmatprep.subr.bf16.mxu0 0
        %781 = vmatpush1.bf16.xpose.msra.mxu0 %v778
        %782 = vmatprep.subr.bf16.mxu0 0
        %783 = vmatpush1.bf16.xpose.msra.mxu0 0
        %784 = vmatprep.subr.bf16.mxu0 0
        %785 = vmatpush1.bf16.xpose.msra.mxu0 0
        %786 = vmatprep.subr.bf16.mxu0 0
        %787 = vmatpush1.bf16.xpose.msra.mxu0 0
        %788 = vmatprep.subr.bf16.mxu0 0
        %789 = vmatpush1.bf16.xpose.msra.mxu0 0
        %790 = vmatprep.subr.bf16.mxu0 0
        %791 = vmatpush1.bf16.xpose.msra.mxu0 0
        %792 = vmatprep.subr.bf16.mxu0 0
        %793 = vmatpush1.bf16.xpose.msra.mxu0 0
        %794 = vmatprep.subr.bf16.mxu0 0
        %795 = vmatpush1.bf16.xpose.msra.mxu0 0
        %796 = vmatprep.subr.bf16.mxu0 0
        %797 = vmatpush1.bf16.xpose.msra.mxu0 0
        %798 = vmatprep.subr.bf16.mxu0 0
        %799 = vmatpush1.bf16.xpose.msra.mxu0 0
        %800 = vmatprep.subr.bf16.mxu0 0
        %801 = vmatpush1.bf16.xpose.msra.mxu0 0
        %802 = vmatprep.subr.bf16.mxu0 0
        %803 = vmatpush1.bf16.xpose.msra.mxu0 0
        %804 = vmatprep.subr.bf16.mxu0 0
        %805 = vmatpush1.bf16.xpose.msra.mxu0 0
        %806 = vmatprep.subr.bf16.mxu0 0
        %807 = vmatpush1.bf16.xpose.msra.mxu0 0
        %808 = vmatprep.subr.bf16.mxu0 0
        %809 = vmatpush1.bf16.xpose.msra.mxu0 0
        %810 = vmatprep.subr.bf16.mxu0 0
        %811 = vmatpush1.bf16.xpose.msra.mxu0 0
        %812 = vmatprep.mubr.bf16.mxu0 0
        %813 = vmatmul.mubr.bf16.gmra.mrb[0].mxu0 %v775
        %v814 = vpop.f32.mrb[0].mxu0
        %v815 = vadd.f32 0.0, %v814
        %v816 = vpop.f32.mrb[0].mxu0
        %v817 = vpop.f32.mrb[0].mxu0
        %v818 = vpop.f32.mrb[0].mxu0
        %819 = vdwg.mxu0
        %v820 = vsel %vm540, %v815, -inf
        %821 = vmax.xlane.f32.xlu0 %v820
        %v822 = vpop.xlane.xlu0 %821
        %v823 = vsub.f32 %v815, %v822
        %v824 = vmul.f32 %v823, 1.442695
        %v825 = vpow.pop %v824
        %v826 = vsel %vm540, %v825, 0.0
        %827 = vadd.xlane.f32.xlu0 %v826
        %v828 = vpop.xlane.xlu0 %827
        %v829 = vrcp.pop %v828
        %v830 = vmul.f32 %v825, %v829
        %v831 = vpack.c.bf16 %v830, %v830
        %832 = vrot.lane.b32.xlu0 %v536, 48
        %v833 = vpop.permute.xlu0 %832
        %v835 = vsel %vm540, %v831, 0
        %v838 = vsel %vm604, %v833, 0
        %840 = vmatprep.subr.bf16.mxu0 0
        %841 = vmatpush1.bf16.msra.mxu0 %v838
        %842 = vmatprep.subr.bf16.mxu0 0
        %843 = vmatpush1.bf16.msra.mxu0 0
        %844 = vmatprep.subr.bf16.mxu0 0
        %845 = vmatpush1.bf16.msra.mxu0 0
        %846 = vmatprep.subr.bf16.mxu0 0
        %847 = vmatpush1.bf16.msra.mxu0 0
        %848 = vmatprep.subr.bf16.mxu0 0
        %849 = vmatpush1.bf16.msra.mxu0 0
        %850 = vmatprep.subr.bf16.mxu0 0
        %851 = vmatpush1.bf16.msra.mxu0 0
        %852 = vmatprep.subr.bf16.mxu0 0
        %853 = vmatpush1.bf16.msra.mxu0 0
        %854 = vmatprep.subr.bf16.mxu0 0
        %855 = vmatpush1.bf16.msra.mxu0 0
        %856 = vmatprep.subr.bf16.mxu0 0
        %857 = vmatpush1.bf16.msra.mxu0 0
        %858 = vmatprep.subr.bf16.mxu0 0
        %859 = vmatpush1.bf16.msra.mxu0 0
        %860 = vmatprep.subr.bf16.mxu0 0
        %861 = vmatpush1.bf16.msra.mxu0 0
        %862 = vmatprep.subr.bf16.mxu0 0
        %863 = vmatpush1.bf16.msra.mxu0 0
        %864 = vmatprep.subr.bf16.mxu0 0
        %865 = vmatpush1.bf16.msra.mxu0 0
        %866 = vmatprep.subr.bf16.mxu0 0
        %867 = vmatpush1.bf16.msra.mxu0 0
        %868 = vmatprep.subr.bf16.mxu0 0
        %869 = vmatpush1.bf16.msra.mxu0 0
        %870 = vmatprep.subr.bf16.mxu0 0
        %871 = vmatpush1.bf16.msra.mxu0 0
        %872 = vmatprep.mubr.bf16.mxu0 0
        %873 = vmatmul.mubr.bf16.gmra.mrb[0].mxu0 %v835
        %v874 = vpop.f32.mrb[0].mxu0
        %v875 = vadd.f32 0.0, %v874
        %v876 = vpop.f32.mrb[0].mxu0
        %v877 = vpop.f32.mrb[0].mxu0
        %v878 = vpop.f32.mrb[0].mxu0
        %879 = vdwg.mxu0
        %v880 = vpack.c.bf16 %v875, %v875
        %v882 = vunpack.c.l.b16 %v880
        %v883 = vpack.c.b16 %v882, %v882
        %884 = vrot.lane.b32.xlu0 %v883, 16
        %v885 = vpop.permute.xlu0 %884
        %vm887 = vcmask 191616
        %888 = vst.msk [vmem:[#allocation2] sm:$0xf] %vm887, %v885
        %889 = vrot.lane.b32.xlu0 %v536, 104
        %v890 = vpop.permute.xlu0 %889
        %891 = vrot.lane.b32.xlu0 %v536, 72
        %v892 = vpop.permute.xlu0 %891
        %v894 = vsel %vm540, %v890, 0
        %v897 = vsel %vm540, %v892, 0
        %899 = vmatprep.subr.bf16.mxu0 0
        %900 = vmatpush1.bf16.xpose.msra.mxu0 %v897
        %901 = vmatprep.subr.bf16.mxu0 0
        %902 = vmatpush1.bf16.xpose.msra.mxu0 0
        %903 = vmatprep.subr.bf16.mxu0 0
        %904 = vmatpush1.bf16.xpose.msra.mxu0 0
        %905 = vmatprep.subr.bf16.mxu0 0
        %906 = vmatpush1.bf16.xpose.msra.mxu0 0
        %907 = vmatprep.subr.bf16.mxu0 0
        %908 = vmatpush1.bf16.xpose.msra.mxu0 0
        %909 = vmatprep.subr.bf16.mxu0 0
        %910 = vmatpush1.bf16.xpose.msra.mxu0 0
        %911 = vmatprep.subr.bf16.mxu0 0
        %912 = vmatpush1.bf16.xpose.msra.mxu0 0
        %913 = vmatprep.subr.bf16.mxu0 0
        %914 = vmatpush1.bf16.xpose.msra.mxu0 0
        %915 = vmatprep.subr.bf16.mxu0 0
        %916 = vmatpush1.bf16.xpose.msra.mxu0 0
        %917 = vmatprep.subr.bf16.mxu0 0
        %918 = vmatpush1.bf16.xpose.msra.mxu0 0
        %919 = vmatprep.subr.bf16.mxu0 0
        %920 = vmatpush1.bf16.xpose.msra.mxu0 0
        %921 = vmatprep.subr.bf16.mxu0 0
        %922 = vmatpush1.bf16.xpose.msra.mxu0 0
        %923 = vmatprep.subr.bf16.mxu0 0
        %924 = vmatpush1.bf16.xpose.msra.mxu0 0
        %925 = vmatprep.subr.bf16.mxu0 0
        %926 = vmatpush1.bf16.xpose.msra.mxu0 0
        %927 = vmatprep.subr.bf16.mxu0 0
        %928 = vmatpush1.bf16.xpose.msra.mxu0 0
        %929 = vmatprep.subr.bf16.mxu0 0
        %930 = vmatpush1.bf16.xpose.msra.mxu0 0
        %931 = vmatprep.mubr.bf16.mxu0 0
        %932 = vmatmul.mubr.bf16.gmra.mrb[0].mxu0 %v894
        %v933 = vpop.f32.mrb[0].mxu0
        %v934 = vadd.f32 0.0, %v933
        %v935 = vpop.f32.mrb[0].mxu0
        %v936 = vpop.f32.mrb[0].mxu0
        %v937 = vpop.f32.mrb[0].mxu0
        %938 = vdwg.mxu0
        %v939 = vsel %vm540, %v934, -inf
        %940 = vmax.xlane.f32.xlu0 %v939
        %v941 = vpop.xlane.xlu0 %940
        %v942 = vsub.f32 %v934, %v941
        %v943 = vmul.f32 %v942, 1.442695
        %v944 = vpow.pop %v943
        %v945 = vsel %vm540, %v944, 0.0
        %946 = vadd.xlane.f32.xlu0 %v945
        %v947 = vpop.xlane.xlu0 %946
        %v948 = vrcp.pop %v947
        %v949 = vmul.f32 %v944, %v948
        %v950 = vpack.c.bf16 %v949, %v949
        %951 = vrot.lane.b32.xlu0 %v536, 40
        %v952 = vpop.permute.xlu0 %951
        %v954 = vsel %vm540, %v950, 0
        %v957 = vsel %vm604, %v952, 0
        %959 = vmatprep.subr.bf16.mxu0 0
        %960 = vmatpush1.bf16.msra.mxu0 %v957
        %961 = vmatprep.subr.bf16.mxu0 0
        %962 = vmatpush1.bf16.msra.mxu0 0
        %963 = vmatprep.subr.bf16.mxu0 0
        %964 = vmatpush1.bf16.msra.mxu0 0
        %965 = vmatprep.subr.bf16.mxu0 0
        %966 = vmatpush1.bf16.msra.mxu0 0
        %967 = vmatprep.subr.bf16.mxu0 0
        %968 = vmatpush1.bf16.msra.mxu0 0
        %969 = vmatprep.subr.bf16.mxu0 0
        %970 = vmatpush1.bf16.msra.mxu0 0
        %971 = vmatprep.subr.bf16.mxu0 0
        %972 = vmatpush1.bf16.msra.mxu0 0
        %973 = vmatprep.subr.bf16.mxu0 0
        %974 = vmatpush1.bf16.msra.mxu0 0
        %975 = vmatprep.subr.bf16.mxu0 0
        %976 = vmatpush1.bf16.msra.mxu0 0
        %977 = vmatprep.subr.bf16.mxu0 0
        %978 = vmatpush1.bf16.msra.mxu0 0
        %979 = vmatprep.subr.bf16.mxu0 0
        %980 = vmatpush1.bf16.msra.mxu0 0
        %981 = vmatprep.subr.bf16.mxu0 0
        %982 = vmatpush1.bf16.msra.mxu0 0
        %983 = vmatprep.subr.bf16.mxu0 0
        %984 = vmatpush1.bf16.msra.mxu0 0
        %985 = vmatprep.subr.bf16.mxu0 0
        %986 = vmatpush1.bf16.msra.mxu0 0
        %987 = vmatprep.subr.bf16.mxu0 0
        %988 = vmatpush1.bf16.msra.mxu0 0
        %989 = vmatprep.subr.bf16.mxu0 0
        %990 = vmatpush1.bf16.msra.mxu0 0
        %991 = vmatprep.mubr.bf16.mxu0 0
        %992 = vmatmul.mubr.bf16.gmra.mrb[0].mxu0 %v954
        %v993 = vpop.f32.mrb[0].mxu0
        %v994 = vadd.f32 0.0, %v993
        %v995 = vpop.f32.mrb[0].mxu0
        %v996 = vpop.f32.mrb[0].mxu0
        %v997 = vpop.f32.mrb[0].mxu0
        %998 = vdwg.mxu0
        %v999 = vpack.c.bf16 %v994, %v994
        %v1001 = vunpack.c.l.b16 %v999
        %v1002 = vpack.c.b16 %v1001, %v1001
        %1003 = vrot.lane.b32.xlu0 %v1002, 24
        %v1004 = vpop.permute.xlu0 %1003
        %vm1006 = vcmask 257216
        %1007 = vst.msk [vmem:[#allocation2] sm:$0xf] %vm1006, %v1004
        %v1008 = vld [vmem:[#allocation2] sm:$0xf]
        %v1009 = vld [vmem:[%s5] sm:$0xf]
        %v1010 = vld [vmem:[%s5 + $0x4] sm:$0xf]
        %v1011 = vld [vmem:[%s5 + $0x8] sm:$0xf]
        %v1012 = vld [vmem:[%s5 + $0xc] sm:$0xf]
        %v1013 = vld [vmem:[%s6] sm:$0x1]
        %v1015 = vlaneseq
        %v1016 = vshrl.u32 %v1015, 7
        %v1017 = vsub.s32 0, %v1016
        %v1018 = vrot.slane %v1013, %v1017
        %v1024 = vunpack.c.l.b16 %v1009
        %v1025 = vunpack.c.l.b16 %v1010
        %v1026 = vunpack.c.l.b16 %v1011
        %v1027 = vunpack.c.l.b16 %v1012
        %v1028 = vpack.c.b16 %v1025, %v1024
        %v1029 = vpack.c.b16 %v1027, %v1026
        %v1033 = vsel %vm440, %v1008, 0
        %1035 = vmatprep.subr.bf16.mxu0 0
        %1036 = vmatpush1.bf16.msra.mxu0 %v1028
        %1037 = vmatprep.subr.bf16.mxu0 0
        %1038 = vmatpush1.bf16.msra.mxu0 %v1029
        %1039 = vmatprep.subr.bf16.mxu0 0
        %1040 = vmatpush1.bf16.msra.mxu0 0
        %1041 = vmatprep.subr.bf16.mxu0 0
        %1042 = vmatpush1.bf16.msra.mxu0 0
        %1043 = vmatprep.subr.bf16.mxu0 0
        %1044 = vmatpush1.bf16.msra.mxu0 0
        %1045 = vmatprep.subr.bf16.mxu0 0
        %1046 = vmatpush1.bf16.msra.mxu0 0
        %1047 = vmatprep.subr.bf16.mxu0 0
        %1048 = vmatpush1.bf16.msra.mxu0 0
        %1049 = vmatprep.subr.bf16.mxu0 0
        %1050 = vmatpush1.bf16.msra.mxu0 0
        %1051 = vmatprep.subr.bf16.mxu0 0
        %1052 = vmatpush1.bf16.msra.mxu0 0
        %1053 = vmatprep.subr.bf16.mxu0 0
        %1054 = vmatpush1.bf16.msra.mxu0 0
        %1055 = vmatprep.subr.bf16.mxu0 0
        %1056 = vmatpush1.bf16.msra.mxu0 0
        %1057 = vmatprep.subr.bf16.mxu0 0
        %1058 = vmatpush1.bf16.msra.mxu0 0
        %1059 = vmatprep.subr.bf16.mxu0 0
        %1060 = vmatpush1.bf16.msra.mxu0 0
        %1061 = vmatprep.subr.bf16.mxu0 0
        %1062 = vmatpush1.bf16.msra.mxu0 0
        %1063 = vmatprep.subr.bf16.mxu0 0
        %1064 = vmatpush1.bf16.msra.mxu0 0
        %1065 = vmatprep.subr.bf16.mxu0 0
        %1066 = vmatpush1.bf16.msra.mxu0 0
        %1067 = vmatprep.mubr.bf16.mxu0 0
        %1068 = vmatmul.mubr.bf16.gmra.mrb[0].mxu0 %v1033
        %v1069 = vpop.f32.mrb[0].mxu0
        %v1070 = vadd.f32 %v1018, %v1069
        %v1071 = vpop.f32.mrb[0].mxu0
        %v1072 = vpop.f32.mrb[0].mxu0
        %v1073 = vpop.f32.mrb[0].mxu0
        %1074 = vdwg.mxu0
        %v1075 = vadd.f32 %v437, %v1070
        %v1076 = vld [vmem:[%s7] sm:$0x1]
        %v1077 = vld [vmem:[%s8] sm:$0x1]
        %v1078 = vsel %vm440, %v1075, 0.0
        %1079 = vadd.xlane.f32.xlu0 %v1078
        %v1080 = vpop.xlane.xlu0 %1079
        %v1081 = vmul.f32 %v1080, %v444
        %v1082 = vsub.f32 %v1075, %v1081
        %v1083 = vmul.f32 %v1082, %v1082
        %v1084 = vsel %vm440, %v1083, 0.0
        %1085 = vadd.xlane.f32.xlu0 %v1084
        %v1086 = vpop.xlane.xlu0 %1085
        %v1087 = vmul.f32 %v1086, %v444
        %v1088 = vadd.f32 %v1087, 1e-05
        %v1089 = vrsqrt.pop %v1088
        %v1090 = vmul.f32 %v1082, %v1089
        %v1092 = vlaneseq
        %v1093 = vshrl.u32 %v1092, 7
        %v1094 = vsub.s32 0, %v1093
        %v1095 = vrot.slane %v1076, %v1094
        %v1097 = vmul.f32 %v1090, %v1095
        %v1099 = vlaneseq
        %v1100 = vshrl.u32 %v1099, 7
        %v1101 = vsub.s32 0, %v1100
        %v1102 = vrot.slane %v1077, %v1101
        %v1104 = vadd.f32 %v1097, %v1102
        %v1105 = vpack.c.bf16 %v1104, %v1104
        %v1106 = vld [vmem:[%s9] sm:$0xf]
        %v1107 = vld [vmem:[%s9 + $0x4] sm:$0xf]
        %v1108 = vld [vmem:[%s9 + $0x8] sm:$0xf]
        %v1109 = vld [vmem:[%s9 + $0xc] sm:$0xf]
        %v1110 = vld [vmem:[%s10] sm:$0x1]
        %v1112 = vlaneseq
        %v1113 = vshrl.u32 %v1112, 7
        %v1114 = vsub.s32 0, %v1113
        %v1115 = vrot.slane %v1110, %v1114
        %v1121 = vunpack.c.l.b16 %v1106
        %v1122 = vunpack.c.l.b16 %v1107
        %v1123 = vunpack.c.l.b16 %v1108
        %v1124 = vunpack.c.l.b16 %v1109
        %v1125 = vpack.c.b16 %v1122, %v1121
        %v1126 = vpack.c.b16 %v1124, %v1123
        %v1130 = vsel %vm440, %v1105, 0
        %1132 = vmatprep.subr.bf16.mxu0 0
        %1133 = vmatpush1.bf16.msra.mxu0 %v1125
        %1134 = vmatprep.subr.bf16.mxu0 0
        %1135 = vmatpush1.bf16.msra.mxu0 %v1126
        %1136 = vmatprep.subr.bf16.mxu0 0
        %1137 = vmatpush1.bf16.msra.mxu0 0
        %1138 = vmatprep.subr.bf16.mxu0 0
        %1139 = vmatpush1.bf16.msra.mxu0 0
        %1140 = vmatprep.subr.bf16.mxu0 0
        %1141 = vmatpush1.bf16.msra.mxu0 0
        %1142 = vmatprep.subr.bf16.mxu0 0
        %1143 = vmatpush1.bf16.msra.mxu0 0
        %1144 = vmatprep.subr.bf16.mxu0 0
        %1145 = vmatpush1.bf16.msra.mxu0 0
        %1146 = vmatprep.subr.bf16.mxu0 0
        %1147 = vmatpush1.bf16.msra.mxu0 0
        %1148 = vmatprep.subr.bf16.mxu0 0
        %1149 = vmatpush1.bf16.msra.mxu0 0
        %1150 = vmatprep.subr.bf16.mxu0 0
        %1151 = vmatpush1.bf16.msra.mxu0 0
        %1152 = vmatprep.subr.bf16.mxu0 0
        %1153 = vmatpush1.bf16.msra.mxu0 0
        %1154 = vmatprep.subr.bf16.mxu0 0
        %1155 = vmatpush1.bf16.msra.mxu0 0
        %1156 = vmatprep.subr.bf16.mxu0 0
        %1157 = vmatpush1.bf16.msra.mxu0 0
        %1158 = vmatprep.subr.bf16.mxu0 0
        %1159 = vmatpush1.bf16.msra.mxu0 0
        %1160 = vmatprep.subr.bf16.mxu0 0
        %1161 = vmatpush1.bf16.msra.mxu0 0
        %1162 = vmatprep.subr.bf16.mxu0 0
        %1163 = vmatpush1.bf16.msra.mxu0 0
        %1164 = vmatprep.mubr.bf16.mxu0 0
        %1165 = vmatmul.mubr.bf16.gmra.mrb[0].mxu0 %v1130
        %v1166 = vpop.f32.mrb[0].mxu0
        %v1167 = vadd.f32 %v1115, %v1166
        %v1168 = vpop.f32.mrb[0].mxu0
        %v1169 = vpop.f32.mrb[0].mxu0
        %v1170 = vpop.f32.mrb[0].mxu0
        %1171 = vdwg.mxu0
        %v1172 = vmul.f32 %v1167, 0.5
        %v1173 = vmul.f32 %v1167, 0.044715
        %v1174 = vmul.f32 %v1173, %v1167
        %v1175 = vmul.f32 %v1174, %v1167
        %v1176 = vadd.f32 %v1167, %v1175
        %v1177 = vmul.f32 %v1176, 0.7978846
        %v1178 = vtanh.pop %v1177
        %v1179 = vadd.f32 %v1178, 1.0
        %v1180 = vmul.f32 %v1172, %v1179
        %v1181 = vpack.c.bf16 %v1180, %v1180
        %v1182 = vld [vmem:[%s11] sm:$0xf]
        %v1183 = vld [vmem:[%s11 + $0x4] sm:$0xf]
        %v1184 = vld [vmem:[%s11 + $0x8] sm:$0xf]
        %v1185 = vld [vmem:[%s11 + $0xc] sm:$0xf]
        %v1186 = vld [vmem:[%s11 + $0x10] sm:$0xf]
        %v1187 = vld [vmem:[%s11 + $0x14] sm:$0xf]
        %v1188 = vld [vmem:[%s11 + $0x18] sm:$0xf]
        %v1189 = vld [vmem:[%s11 + $0x1c] sm:$0xf]
        %v1190 = vld [vmem:[%s11 + $0x20] sm:$0xf]
        %v1191 = vld [vmem:[%s11 + $0x24] sm:$0xf]
        %v1192 = vld [vmem:[%s11 + $0x28] sm:$0xf]
        %v1193 = vld [vmem:[%s11 + $0x2c] sm:$0xf]
        %v1194 = vld [vmem:[%s11 + $0x30] sm:$0xf]
        %v1195 = vld [vmem:[%s11 + $0x34] sm:$0xf]
        %v1196 = vld [vmem:[%s11 + $0x38] sm:$0xf]
        %v1197 = vld [vmem:[%s11 + $0x3c] sm:$0xf]
        %v1198 = vld [vmem:[%s12] sm:$0x1]
        %v1200 = vlaneseq
        %v1201 = vshrl.u32 %v1200, 7
        %v1202 = vsub.s32 0, %v1201
        %v1203 = vrot.slane %v1198, %v1202
        %v1221 = vunpack.c.l.b16 %v1182
        %v1222 = vunpack.c.l.b16 %v1183
        %v1223 = vunpack.c.l.b16 %v1184
        %v1224 = vunpack.c.l.b16 %v1185
        %v1225 = vunpack.c.l.b16 %v1186
        %v1226 = vunpack.c.l.b16 %v1187
        %v1227 = vunpack.c.l.b16 %v1188
        %v1228 = vunpack.c.l.b16 %v1189
        %v1229 = vunpack.c.l.b16 %v1190
        %v1230 = vunpack.c.l.b16 %v1191
        %v1231 = vunpack.c.l.b16 %v1192
        %v1232 = vunpack.c.l.b16 %v1193
        %v1233 = vunpack.c.l.b16 %v1194
        %v1234 = vunpack.c.l.b16 %v1195
        %v1235 = vunpack.c.l.b16 %v1196
        %v1236 = vunpack.c.l.b16 %v1197
        %v1237 = vpack.c.b16 %v1222, %v1221
        %v1238 = vpack.c.b16 %v1224, %v1223
        %v1239 = vpack.c.b16 %v1226, %v1225
        %v1240 = vpack.c.b16 %v1228, %v1227
        %v1241 = vpack.c.b16 %v1230, %v1229
        %v1242 = vpack.c.b16 %v1232, %v1231
        %v1243 = vpack.c.b16 %v1234, %v1233
        %v1244 = vpack.c.b16 %v1236, %v1235
        %1253 = vmatprep.subr.bf16.mxu0 0
        %1254 = vmatpush1.bf16.msra.mxu0 %v1237
        %1255 = vmatprep.subr.bf16.mxu0 0
        %1256 = vmatpush1.bf16.msra.mxu0 %v1238
        %1257 = vmatprep.subr.bf16.mxu0 0
        %1258 = vmatpush1.bf16.msra.mxu0 %v1239
        %1259 = vmatprep.subr.bf16.mxu0 0
        %1260 = vmatpush1.bf16.msra.mxu0 %v1240
        %1261 = vmatprep.subr.bf16.mxu0 0
        %1262 = vmatpush1.bf16.msra.mxu0 %v1241
        %1263 = vmatprep.subr.bf16.mxu0 0
        %1264 = vmatpush1.bf16.msra.mxu0 %v1242
        %1265 = vmatprep.subr.bf16.mxu0 0
        %1266 = vmatpush1.bf16.msra.mxu0 %v1243
        %1267 = vmatprep.subr.bf16.mxu0 0
        %1268 = vmatpush1.bf16.msra.mxu0 %v1244
        %1269 = vmatprep.subr.bf16.mxu0 0
        %1270 = vmatpush1.bf16.msra.mxu0 0
        %1271 = vmatprep.subr.bf16.mxu0 0
        %1272 = vmatpush1.bf16.msra.mxu0 0
        %1273 = vmatprep.subr.bf16.mxu0 0
        %1274 = vmatpush1.bf16.msra.mxu0 0
        %1275 = vmatprep.subr.bf16.mxu0 0
        %1276 = vmatpush1.bf16.msra.mxu0 0
        %1277 = vmatprep.subr.bf16.mxu0 0
        %1278 = vmatpush1.bf16.msra.mxu0 0
        %1279 = vmatprep.subr.bf16.mxu0 0
        %1280 = vmatpush1.bf16.msra.mxu0 0
        %1281 = vmatprep.subr.bf16.mxu0 0
        %1282 = vmatpush1.bf16.msra.mxu0 0
        %1283 = vmatprep.subr.bf16.mxu0 0
        %1284 = vmatpush1.bf16.msra.mxu0 0
        %1285 = vmatprep.mubr.bf16.mxu0 0
        %1286 = vmatmul.mubr.bf16.gmra.mrb[0].mxu0 %v1181
        %v1287 = vpop.f32.mrb[0].mxu0
        %v1288 = vadd.f32 %v1203, %v1287
        %v1289 = vpop.f32.mrb[0].mxu0
        %v1290 = vpop.f32.mrb[0].mxu0
        %v1291 = vpop.f32.mrb[0].mxu0
        %1292 = vdwg.mxu0
        %v1293 = vadd.f32 %v1075, %v1288
        %1294 = vst.msk [vmem:[%s431] sm:$0xff] %vm440, %v1293
        %s1295 = sand.u32 %s313, 1
        %s1296 = scalar_lea.sflag [#allocation4], %s1295
        %s1297 = sand.u32 %s313, 1
        %s1298 = smul.addr %s1297, 8
        %s1299 = scalar_lea.vmem [#allocation3], %s1298
        // Predicated region
        $region73: #{tpu_custom_call.1} parent=71 // pred_check
          %p1300 = pneg %p323
        $region74: #{tpu_custom_call.1} parent=71 // pred_check_branch
          %1302 = sbr.rel (%p1300) target = $region76
        $region75: #{tpu_custom_call.1} parent=71 // pred_region
          %s1304 = ssub.s32 128, 128
          %1305 = vsyncadd %s1296, %s1304
          %s1306 = smul.addr %s27, 128
          %s1307 = scalar_lea.hbm %s13, %s1306
          %s1309 = sshll.u32 %s1299, 4
          %s1310 = int_to_ptr.vmem [resolvable:$true] %s1309
          %1312 = dma.vmem_to_hbm [thread:$0]  %s1310, 128, %s1307, %s1296
        $region76: #{tpu_custom_call.1} parent=71 // pred_fallthru
          _
      $region72: #{tpu_custom_call.1} parent=5 // pred_fallthru
        _
      %p1313 = scmp.le.s32.totalorder 2, %s22
      // Predicated region
      $region77: #{tpu_custom_call.1} parent=5 // pred_check
        %p1314 = pneg %p1313
      $region78: #{tpu_custom_call.1} parent=5 // pred_check_branch
        %1316 = sbr.rel (%p1314) target = $region80
      $region79: #{tpu_custom_call.1} parent=5 // pred_region
        %s1317 = ssub.s32 %s22, 2
        // Predicated region
        $region81: #{tpu_custom_call.1} parent=79 // pred_check
          %p1318 = pneg %p329
        $region82: #{tpu_custom_call.1} parent=79 // pred_check_branch
          %1320 = sbr.rel (%p1318) target = $region84
        $region83: #{tpu_custom_call.1} parent=79 // pred_region
          %s1321 = sand.u32 %s314, 1
          %s1322 = scalar_lea.sflag [#allocation4], %s1321
          %s1323 = sand.u32 %s314, 1
          %s1324 = smul.addr %s1323, 8
          %s1325 = scalar_lea.vmem [#allocation3], %s1324
          %1326 = dma.done %s1322, 128
        $region84: #{tpu_custom_call.1} parent=79 // pred_fallthru
          _
      $region80: #{tpu_custom_call.1} parent=5 // pred_fallthru
        _
    $region6: #{tpu_custom_call.1} parent=1 // loop_footer
      %s26 = sadd.s32 1, %s22
    $region7: #{tpu_custom_call.1} parent=1 // loop_footer_branch
      %21 = sbr.rel target = $region3
    $region8: #{tpu_custom_call.1} parent=1 // loop_exit
      _
    %1327 = vsyncpa [#allocation4], 1
    %s1328 = scalar_lea.sflag [#allocation4], 1
    %1329 = vsyncpa %s1328, 1

</llo_original>
